<compile_context>
chip_gen: v7x
topology: tpu7x:2x2x1
jax: 0.10.0
libtpu: 0.0.40
codegen_flags: <defaults>
</compile_context>

<pallas_src>
import functools

import numpy as np
import jax
import jax.numpy as jnp
from jax import lax
from jax.experimental import pallas as pl
from jax.experimental.pallas import tpu as pltpu


def _unpool_fused_kernel(B, N, M, C, head, head_dim, bn_eps,
                         m1_ref, m2_ref,
                         wqkv_ref, bqkv_ref, wmh_ref, bmh_ref,
                         w1_ref, b1_ref, bngb_ref, w2_ref, b2_ref,
                         out_ref):
    """Whole forward pass for all B batch elements in one kernel invocation."""
    f32, bf16 = jnp.float32, jnp.bfloat16
    BN = B * N

    # ---- NCL -> tokens-major (rows = batch*length, lanes = channels), in VMEM ----
    m1_tok = jnp.concatenate([m1_ref[b].T for b in range(B)], axis=0)   # (B*N, C) f32
    m2_tok = jnp.concatenate([m2_ref[b].T for b in range(B)], axis=0)   # (B*M, C) f32
    m1b = m1_tok.astype(bf16)
    m2b = m2_tok.astype(bf16)

    # ---- fused Q/K/V projection: ONE MXU weight-push on stacked rows ----
    # rows = [motion1 tokens ; motion2 tokens]; columns of wqkv = [Wq*scale | Wk | Wv].
    # Q is read from the motion1 rows, K/V from the motion2 rows.
    rows = jnp.concatenate([m1b, m2b], axis=0)                          # (B*(N+M), C)
    proj = (jnp.dot(rows, wqkv_ref[...], preferred_element_type=f32)
            + bqkv_ref[...])                                            # (B*(N+M), 3C) f32
    q_all = proj[:BN, 0:C]              # (B*N, C)  scale pre-folded
    kv_all = proj[BN:, C:3 * C]         # (B*M, 2C) = [K | V]

    # ---- per-batch, per-head attention; head outputs kept in registers ----
    o_rows = []
    for b in range(B):
        qb = q_all[b * N:(b + 1) * N, :].astype(bf16)                   # (N, C)
        kvb = kv_all[b * M:(b + 1) * M, :].astype(bf16)                 # (M, 2C)
        kb = kvb[:, 0:C]
        vb = kvb[:, C:2 * C]
        heads = []
        for h in range(head):
            sl = slice(h * head_dim, (h + 1) * head_dim)
            s = lax.dot_general(qb[:, sl], kb[:, sl], (((1,), (1,)), ((), ())),
                                preferred_element_type=f32)             # (N, M)
            s = s - jnp.max(s, axis=-1, keepdims=True)
            p = jnp.exp(s)
            p = p * pl.reciprocal(jnp.sum(p, axis=-1, keepdims=True))   # exact recip
            heads.append(jnp.dot(p.astype(bf16), vb[:, sl],
                                 preferred_element_type=f32))           # (N, d)
        o_rows.append(jnp.concatenate(heads, axis=1))                   # (N, C)
    o_all = jnp.concatenate(o_rows, axis=0)                             # (B*N, C)

    # ---- mh_filter (single C->C matmul over all heads/batches) ----
    add = (jnp.dot(o_all.astype(bf16), wmh_ref[...], preferred_element_type=f32)
           + bmh_ref[...])                                              # (B*N, C)

    # ---- cat_filter conv#1 on concat([motion1, add_value], channels), unsplit W1 ----
    h1 = (jnp.dot(jnp.concatenate([m1b, add.astype(bf16)], axis=1), w1_ref[...],
                  preferred_element_type=f32) + b1_ref[...])            # (B*N, 2C) f32

    # ---- BatchNorm over (batch, length): training-mode biased variance, two-pass ----
    mean = jnp.mean(h1, axis=0, keepdims=True)                          # (1, 2C)
    cen = h1 - mean
    var = jnp.mean(cen * cen, axis=0, keepdims=True)
    inv_std = lax.rsqrt(var + bn_eps)
    h1n = cen * (inv_std * bngb_ref[0:1, :]) + bngb_ref[1:2, :]
    h1n = jnp.maximum(h1n, 0.0)                                         # ReLU

    # ---- cat_filter conv#2 + residual, stored directly in NCL layout ----
    h2 = (jnp.dot(h1n.astype(bf16), w2_ref[...], preferred_element_type=f32)
          + b2_ref[...])                                                # (B*N, C)
    for b in range(B):
        out_ref[b] = (m1_ref[b] + h2[b * N:(b + 1) * N, :].T).astype(out_ref.dtype)


def _vmem_limit_bytes(nbytes):
    # Never request the full physical VMEM (v7x has only 64 MiB/TC); leave headroom
    # for compiler scratch, semaphores and double-buffered weight blocks.
    try:
        cap = int(pltpu.get_tpu_info().vmem_capacity_bytes) * 3 // 4
    except Exception:
        cap = 48 * 2 ** 20
    return int(min(cap, max(8 * 2 ** 20, 6 * int(nbytes))))


def init_params(key, channels):
    """Deterministic Conv1d-like init (uniform +-1/sqrt(fan_in)); BN gamma=1, beta=0."""
    C = channels
    ks = jax.random.split(key, 12)

    def w(k, o, i):
        b = 1.0 / np.sqrt(i)
        return jax.random.uniform(k, (o, i), jnp.float32, -b, b)

    def b(k, o, i):
        bd = 1.0 / np.sqrt(i)
        return jax.random.uniform(k, (o,), jnp.float32, -bd, bd)

    return dict(
        wq=w(ks[0], C, C), bq=b(ks[1], C, C),
        wk=w(ks[2], C, C), bk=b(ks[3], C, C),
        wv=w(ks[4], C, C), bv=b(ks[5], C, C),
        wmh=w(ks[6], C, C), bmh=b(ks[7], C, C),
        w1=w(ks[8], 2 * C, 2 * C), b1=b(ks[9], 2 * C, 2 * C),
        gamma=jnp.ones((2 * C,), jnp.float32),
        beta=jnp.zeros((2 * C,), jnp.float32),
        w2=w(ks[10], C, 2 * C), b2=b(ks[11], C, 2 * C),
    )


def unpool_forward(x, x_ori, params, head, bn_eps=1e-5):
    """Unpool.forward(x, x_ori): motion1 = x_ori (NCL), motion2 = x (NCL)."""
    B, C, M = x.shape
    Bo, Co, N = x_ori.shape
    assert (B, C) == (Bo, Co) and C % head == 0
    d = C // head
    C2 = 2 * C
    f32, bf16 = jnp.float32, jnp.bfloat16
    scale = 1.0 / (d ** 0.5)

    # ---- parameter slabs (weights pre-transposed for tokens-major matmuls, bf16) ----
    w_qkv = jnp.concatenate([params['wq'].T * scale, params['wk'].T, params['wv'].T],
                            axis=1).astype(bf16)                        # (C, 3C)
    b_qkv = jnp.concatenate([params['bq'] * scale, params['bk'], params['bv']]
                            ).reshape(1, 3 * C).astype(f32)             # (1, 3C)
    w_mh = params['wmh'].T.astype(bf16)                                 # (C, C)
    b_mh = params['bmh'].reshape(1, C).astype(f32)
    w1 = params['w1'].T.astype(bf16)                                    # (2C, 2C) unsplit
    b1 = params['b1'].reshape(1, C2).astype(f32)
    bn_gb = jnp.stack([params['gamma'], params['beta']], axis=0).astype(f32)  # (2, 2C)
    w2 = params['w2'].T.astype(bf16)                                    # (2C, C)
    b2 = params['b2'].reshape(1, C).astype(f32)

    m1 = x_ori.astype(f32)      # motion1 (B, C, N), NCL consumed directly
    m2 = x.astype(f32)          # motion2 (B, C, M), NCL consumed directly

    par_bytes = sum(int(np.prod(a.shape)) * a.dtype.itemsize
                    for a in (w_qkv, b_qkv, w_mh, b_mh, w1, b1, bn_gb, w2, b2))
    act_bytes = 4 * (m1.size + m2.size + B * C * N                      # I/O blocks
                     + B * (N + M) * 3 * C + B * N * (2 * C2 + 2 * C))  # in-kernel temps
    vmem_limit = _vmem_limit_bytes(act_bytes + par_bytes)

    def full(*shape):
        return pl.BlockSpec(shape, lambda i: (0,) * len(shape))

    # TODO(synk): SyncBatchNorm's cross-replica statistics sync is not implemented;
    # single-device full-batch statistics are used (matches the single-device reference).
    out = pl.pallas_call(
        functools.partial(_unpool_fused_kernel, B, N, M, C, head, d, bn_eps),
        out_shape=jax.ShapeDtypeStruct((B, C, N), f32),
        grid_spec=pltpu.PrefetchScalarGridSpec(
            num_scalar_prefetch=0,
            grid=(1,),
            in_specs=[
                full(B, C, N),        # motion1 (NCL)
                full(B, C, M),        # motion2 (NCL)
                full(C, 3 * C),       # [Wq*scale | Wk | Wv]  (bf16)
                full(1, 3 * C),       # [bq*scale | bk | bv]
                full(C, C),           # Wmh (bf16)
                full(1, C),           # bmh
                full(C2, C2),         # W1 (bf16, unsplit)
                full(1, C2),          # b1
                full(2, C2),          # gamma, beta
                full(C2, C),          # W2 (bf16)
                full(1, C),           # b2
            ],
            out_specs=full(B, C, N),
        ),
        compiler_params=pltpu.CompilerParams(
            dimension_semantics=("arbitrary",),
            vmem_limit_bytes=vmem_limit),
    )(m1, m2, w_qkv, b_qkv, w_mh, b_mh, w1, b1, bn_gb, w2, b2)
    return out


def reference_forward(x, x_ori, params, head):
    """Pure-JAX reference with exact PyTorch (NCL, f32) semantics."""
    B, C, _ = x_ori.shape
    d = C // head

    def conv1d(w, b, inp):
        return jnp.einsum('oi,bil->bol', w, inp,
                          precision=jax.lax.Precision.HIGHEST) + b[None, :, None]

    m1, m2 = x_ori, x
    q = conv1d(params['wq'], params['bq'], m1).reshape(B, head, d, -1)
    k = conv1d(params['wk'], params['bk'], m2).reshape(B, head, d, -1)
    v = conv1d(params['wv'], params['bv'], m2).reshape(B, head, d, -1)
    s = jnp.einsum('bhdn,bhdm->bhnm', q, k,
                   precision=jax.lax.Precision.HIGHEST) / (d ** 0.5)
    p = jax.nn.softmax(s, axis=-1)
    add = jnp.einsum('bhnm,bhdm->bhdn', p, v,
                     precision=jax.lax.Precision.HIGHEST).reshape(B, C, -1)
    add = conv1d(params['wmh'], params['bmh'], add)
    cat = jnp.concatenate([m1, add], axis=1)
    h1 = conv1d(params['w1'], params['b1'], cat)
    mean = jnp.mean(h1, axis=(0, 2), keepdims=True)
    var = jnp.mean((h1 - mean) ** 2, axis=(0, 2), keepdims=True)
    h1n = (h1 - mean) / jnp.sqrt(var + 1e-5)
    h1n = h1n * params['gamma'][None, :, None] + params['beta'][None, :, None]
    h1n = jnp.maximum(h1n, 0.0)
    h2 = conv1d(params['w2'], params['b2'], h1n)
    return m1 + h2


if __name__ == "__main__":
    B, C, HEAD = 2, 32, 4
    M, N = 8, 16   # x (pooled / shorter), x_ori (original / longer)

    key = jax.random.PRNGKey(0)
    k_params, k_x, k_xo = jax.random.split(key, 3)
    params = init_params(k_params, C)
    x = jax.random.normal(k_x, (B, C, M), jnp.float32)       # motion2
    x_ori = jax.random.normal(k_xo, (B, C, N), jnp.float32)  # motion1

    out = jax.block_until_ready(unpool_forward(x, x_ori, params, HEAD))
    ref = jax.block_until_ready(reference_forward(x, x_ori, params, HEAD))

    assert out.shape == (B, C, N), out.shape
    # bf16 MXU operands (f32 accumulate, exact-reciprocal softmax) -> small tolerance
    np.testing.assert_allclose(np.asarray(out), np.asarray(ref), rtol=3e-2, atol=3e-2)

    print("KERNEL_OK")
</pallas_src>

<mosaic_0001>
module attributes {stable_mosaic.version = 11 : i64} {
  func.func @_unpool_fused_kernel(%arg0: i32, %arg1: memref<2x32x16xf32, #tpu.memory_space<vmem>>, %arg2: memref<2x32x8xf32, #tpu.memory_space<vmem>>, %arg3: memref<32x96xbf16, #tpu.memory_space<vmem>>, %arg4: memref<1x96xf32, #tpu.memory_space<vmem>>, %arg5: memref<32x32xbf16, #tpu.memory_space<vmem>>, %arg6: memref<1x32xf32, #tpu.memory_space<vmem>>, %arg7: memref<64x64xbf16, #tpu.memory_space<vmem>>, %arg8: memref<1x64xf32, #tpu.memory_space<vmem>>, %arg9: memref<2x64xf32, #tpu.memory_space<vmem>>, %arg10: memref<64x32xbf16, #tpu.memory_space<vmem>>, %arg11: memref<1x32xf32, #tpu.memory_space<vmem>>, %arg12: memref<2x32x16xf32, #tpu.memory_space<vmem>>) attributes {dimension_semantics = [#tpu.dimension_semantics<arbitrary>], iteration_bounds = array<i64: 1>, scalar_prefetch = 0 : i64, scratch_operands = 0 : i64, tpu.core_type = #tpu.core_type<tc>, window_params = [{pipeline_mode = #tpu.pipeline_mode<synchronous>, transform_indices = @transform_0, window_bounds = array<i64: 2, 32, 16>}, {pipeline_mode = #tpu.pipeline_mode<synchronous>, transform_indices = @transform_1, window_bounds = array<i64: 2, 32, 8>}, {pipeline_mode = #tpu.pipeline_mode<synchronous>, transform_indices = @transform_2, window_bounds = array<i64: 32, 96>}, {pipeline_mode = #tpu.pipeline_mode<synchronous>, transform_indices = @transform_3, window_bounds = array<i64: 1, 96>}, {pipeline_mode = #tpu.pipeline_mode<synchronous>, transform_indices = @transform_4, window_bounds = array<i64: 32, 32>}, {pipeline_mode = #tpu.pipeline_mode<synchronous>, transform_indices = @transform_5, window_bounds = array<i64: 1, 32>}, {pipeline_mode = #tpu.pipeline_mode<synchronous>, transform_indices = @transform_6, window_bounds = array<i64: 64, 64>}, {pipeline_mode = #tpu.pipeline_mode<synchronous>, transform_indices = @transform_7, window_bounds = array<i64: 1, 64>}, {pipeline_mode = #tpu.pipeline_mode<synchronous>, transform_indices = @transform_8, window_bounds = array<i64: 2, 64>}, {pipeline_mode = #tpu.pipeline_mode<synchronous>, transform_indices = @transform_9, window_bounds = array<i64: 64, 32>}, {pipeline_mode = #tpu.pipeline_mode<synchronous>, transform_indices = @transform_10, window_bounds = array<i64: 1, 32>}, {pipeline_mode = #tpu.pipeline_mode<synchronous>, transform_indices = @transform_11, window_bounds = array<i64: 2, 32, 16>}]} {
    %c0 = arith.constant 0 : index
    %c0_0 = arith.constant 0 : index
    %c0_1 = arith.constant 0 : index
    %0 = vector.load %arg1[%c0, %c0_0, %c0_1] : memref<2x32x16xf32, #tpu.memory_space<vmem>>, vector<1x32x16xf32>
    %1 = vector.shape_cast %0 : vector<1x32x16xf32> to vector<32x16xf32>
    %2 = tpu.transpose %1, [1, 0] : vector<32x16xf32> -> vector<16x32xf32>
    %c1 = arith.constant 1 : index
    %c0_2 = arith.constant 0 : index
    %c0_3 = arith.constant 0 : index
    %3 = vector.load %arg1[%c1, %c0_2, %c0_3] : memref<2x32x16xf32, #tpu.memory_space<vmem>>, vector<1x32x16xf32>
    %4 = vector.shape_cast %3 : vector<1x32x16xf32> to vector<32x16xf32>
    %5 = tpu.transpose %4, [1, 0] : vector<32x16xf32> -> vector<16x32xf32>
    %6 = tpu.concatenate %2, %5 in 0 : vector<16x32xf32>, vector<16x32xf32> -> vector<32x32xf32>
    %c0_4 = arith.constant 0 : index
    %c0_5 = arith.constant 0 : index
    %c0_6 = arith.constant 0 : index
    %7 = vector.load %arg2[%c0_4, %c0_5, %c0_6] : memref<2x32x8xf32, #tpu.memory_space<vmem>>, vector<1x32x8xf32>
    %8 = vector.shape_cast %7 : vector<1x32x8xf32> to vector<32x8xf32>
    %9 = tpu.transpose %8, [1, 0] : vector<32x8xf32> -> vector<8x32xf32>
    %c1_7 = arith.constant 1 : index
    %c0_8 = arith.constant 0 : index
    %c0_9 = arith.constant 0 : index
    %10 = vector.load %arg2[%c1_7, %c0_8, %c0_9] : memref<2x32x8xf32, #tpu.memory_space<vmem>>, vector<1x32x8xf32>
    %11 = vector.shape_cast %10 : vector<1x32x8xf32> to vector<32x8xf32>
    %12 = tpu.transpose %11, [1, 0] : vector<32x8xf32> -> vector<8x32xf32>
    %13 = tpu.concatenate %9, %12 in 0 : vector<8x32xf32>, vector<8x32xf32> -> vector<16x32xf32>
    %14 = arith.truncf %6 : vector<32x32xf32> to vector<32x32xbf16>
    %15 = arith.truncf %13 : vector<16x32xf32> to vector<16x32xbf16>
    %16 = tpu.concatenate %14, %15 in 0 : vector<32x32xbf16>, vector<16x32xbf16> -> vector<48x32xbf16>
    %c0_10 = arith.constant 0 : index
    %c0_11 = arith.constant 0 : index
    %17 = vector.load %arg3[%c0_10, %c0_11] : memref<32x96xbf16, #tpu.memory_space<vmem>>, vector<32x96xbf16>
    %cst = arith.constant dense<0.000000e+00> : vector<48x96xf32>
    %18 = tpu.matmul %16, %17, %cst {dimension_numbers = #tpu.dot_dimension_numbers<[1], [0], [0], [1], [0, 0, 1, 1], [], []>} : vector<48x32xbf16>, vector<32x96xbf16>, vector<48x96xf32> -> vector<48x96xf32>
    %c0_12 = arith.constant 0 : index
    %c0_13 = arith.constant 0 : index
    %19 = vector.load %arg4[%c0_12, %c0_13] : memref<1x96xf32, #tpu.memory_space<vmem>>, vector<1x96xf32>
    %20 = vector.broadcast %19 : vector<1x96xf32> to vector<48x96xf32>
    %21 = arith.addf %18, %20 : vector<48x96xf32>
    %22 = vector.extract_strided_slice %21 {offsets = [0, 0], sizes = [32, 32], strides = [1, 1]} : vector<48x96xf32> to vector<32x32xf32>
    %23 = vector.extract_strided_slice %21 {offsets = [32, 32], sizes = [16, 64], strides = [1, 1]} : vector<48x96xf32> to vector<16x64xf32>
    %24 = vector.extract_strided_slice %22 {offsets = [0, 0], sizes = [16, 32], strides = [1, 1]} : vector<32x32xf32> to vector<16x32xf32>
    %25 = arith.truncf %24 : vector<16x32xf32> to vector<16x32xbf16>
    %26 = vector.extract_strided_slice %23 {offsets = [0, 0], sizes = [8, 64], strides = [1, 1]} : vector<16x64xf32> to vector<8x64xf32>
    %27 = arith.truncf %26 : vector<8x64xf32> to vector<8x64xbf16>
    %28 = vector.extract_strided_slice %27 {offsets = [0, 0], sizes = [8, 32], strides = [1, 1]} : vector<8x64xbf16> to vector<8x32xbf16>
    %29 = vector.extract_strided_slice %27 {offsets = [0, 32], sizes = [8, 32], strides = [1, 1]} : vector<8x64xbf16> to vector<8x32xbf16>
    %30 = vector.extract_strided_slice %25 {offsets = [0, 0], sizes = [16, 8], strides = [1, 1]} : vector<16x32xbf16> to vector<16x8xbf16>
    %31 = vector.extract_strided_slice %28 {offsets = [0, 0], sizes = [8, 8], strides = [1, 1]} : vector<8x32xbf16> to vector<8x8xbf16>
    %cst_14 = arith.constant dense<0.000000e+00> : vector<16x8xf32>
    %32 = tpu.matmul %30, %31, %cst_14 {dimension_numbers = #tpu.dot_dimension_numbers<[1], [1], [0], [0], [0, 0, 1, 0], [], []>} : vector<16x8xbf16>, vector<8x8xbf16>, vector<16x8xf32> -> vector<16x8xf32>
    %cst_15 = arith.constant dense<0xFF800000> : vector<16xf32>
    %33 = vector.multi_reduction <maximumf>, %32, %cst_15 [1] : vector<16x8xf32> to vector<16xf32>
    %34 = vector.shape_cast %33 : vector<16xf32> to vector<16x1xf32>
    %35 = vector.broadcast %34 : vector<16x1xf32> to vector<16x8xf32>
    %36 = arith.subf %32, %35 : vector<16x8xf32>
    %37 = math.exp %36 : vector<16x8xf32>
    %cst_16 = arith.constant dense<0.000000e+00> : vector<16xf32>
    %38 = vector.multi_reduction <add>, %37, %cst_16 [1] : vector<16x8xf32> to vector<16xf32>
    %39 = vector.shape_cast %38 : vector<16xf32> to vector<16x1xf32>
    %40 = tpu.reciprocal %39 : vector<16x1xf32> -> vector<16x1xf32>
    %41 = vector.broadcast %40 : vector<16x1xf32> to vector<16x8xf32>
    %42 = arith.mulf %37, %41 : vector<16x8xf32>
    %43 = arith.truncf %42 : vector<16x8xf32> to vector<16x8xbf16>
    %44 = vector.extract_strided_slice %29 {offsets = [0, 0], sizes = [8, 8], strides = [1, 1]} : vector<8x32xbf16> to vector<8x8xbf16>
    %cst_17 = arith.constant dense<0.000000e+00> : vector<16x8xf32>
    %45 = tpu.matmul %43, %44, %cst_17 {dimension_numbers = #tpu.dot_dimension_numbers<[1], [0], [0], [1], [0, 0, 1, 1], [], []>} : vector<16x8xbf16>, vector<8x8xbf16>, vector<16x8xf32> -> vector<16x8xf32>
    %46 = vector.extract_strided_slice %25 {offsets = [0, 8], sizes = [16, 8], strides = [1, 1]} : vector<16x32xbf16> to vector<16x8xbf16>
    %47 = vector.extract_strided_slice %28 {offsets = [0, 8], sizes = [8, 8], strides = [1, 1]} : vector<8x32xbf16> to vector<8x8xbf16>
    %cst_18 = arith.constant dense<0.000000e+00> : vector<16x8xf32>
    %48 = tpu.matmul %46, %47, %cst_18 {dimension_numbers = #tpu.dot_dimension_numbers<[1], [1], [0], [0], [0, 0, 1, 0], [], []>} : vector<16x8xbf16>, vector<8x8xbf16>, vector<16x8xf32> -> vector<16x8xf32>
    %cst_19 = arith.constant dense<0xFF800000> : vector<16xf32>
    %49 = vector.multi_reduction <maximumf>, %48, %cst_19 [1] : vector<16x8xf32> to vector<16xf32>
    %50 = vector.shape_cast %49 : vector<16xf32> to vector<16x1xf32>
    %51 = vector.broadcast %50 : vector<16x1xf32> to vector<16x8xf32>
    %52 = arith.subf %48, %51 : vector<16x8xf32>
    %53 = math.exp %52 : vector<16x8xf32>
    %cst_20 = arith.constant dense<0.000000e+00> : vector<16xf32>
    %54 = vector.multi_reduction <add>, %53, %cst_20 [1] : vector<16x8xf32> to vector<16xf32>
    %55 = vector.shape_cast %54 : vector<16xf32> to vector<16x1xf32>
    %56 = tpu.reciprocal %55 : vector<16x1xf32> -> vector<16x1xf32>
    %57 = vector.broadcast %56 : vector<16x1xf32> to vector<16x8xf32>
    %58 = arith.mulf %53, %57 : vector<16x8xf32>
    %59 = arith.truncf %58 : vector<16x8xf32> to vector<16x8xbf16>
    %60 = vector.extract_strided_slice %29 {offsets = [0, 8], sizes = [8, 8], strides = [1, 1]} : vector<8x32xbf16> to vector<8x8xbf16>
    %cst_21 = arith.constant dense<0.000000e+00> : vector<16x8xf32>
    %61 = tpu.matmul %59, %60, %cst_21 {dimension_numbers = #tpu.dot_dimension_numbers<[1], [0], [0], [1], [0, 0, 1, 1], [], []>} : vector<16x8xbf16>, vector<8x8xbf16>, vector<16x8xf32> -> vector<16x8xf32>
    %62 = vector.extract_strided_slice %25 {offsets = [0, 16], sizes = [16, 8], strides = [1, 1]} : vector<16x32xbf16> to vector<16x8xbf16>
    %63 = vector.extract_strided_slice %28 {offsets = [0, 16], sizes = [8, 8], strides = [1, 1]} : vector<8x32xbf16> to vector<8x8xbf16>
    %cst_22 = arith.constant dense<0.000000e+00> : vector<16x8xf32>
    %64 = tpu.matmul %62, %63, %cst_22 {dimension_numbers = #tpu.dot_dimension_numbers<[1], [1], [0], [0], [0, 0, 1, 0], [], []>} : vector<16x8xbf16>, vector<8x8xbf16>, vector<16x8xf32> -> vector<16x8xf32>
    %cst_23 = arith.constant dense<0xFF800000> : vector<16xf32>
    %65 = vector.multi_reduction <maximumf>, %64, %cst_23 [1] : vector<16x8xf32> to vector<16xf32>
    %66 = vector.shape_cast %65 : vector<16xf32> to vector<16x1xf32>
    %67 = vector.broadcast %66 : vector<16x1xf32> to vector<16x8xf32>
    %68 = arith.subf %64, %67 : vector<16x8xf32>
    %69 = math.exp %68 : vector<16x8xf32>
    %cst_24 = arith.constant dense<0.000000e+00> : vector<16xf32>
    %70 = vector.multi_reduction <add>, %69, %cst_24 [1] : vector<16x8xf32> to vector<16xf32>
    %71 = vector.shape_cast %70 : vector<16xf32> to vector<16x1xf32>
    %72 = tpu.reciprocal %71 : vector<16x1xf32> -> vector<16x1xf32>
    %73 = vector.broadcast %72 : vector<16x1xf32> to vector<16x8xf32>
    %74 = arith.mulf %69, %73 : vector<16x8xf32>
    %75 = arith.truncf %74 : vector<16x8xf32> to vector<16x8xbf16>
    %76 = vector.extract_strided_slice %29 {offsets = [0, 16], sizes = [8, 8], strides = [1, 1]} : vector<8x32xbf16> to vector<8x8xbf16>
    %cst_25 = arith.constant dense<0.000000e+00> : vector<16x8xf32>
    %77 = tpu.matmul %75, %76, %cst_25 {dimension_numbers = #tpu.dot_dimension_numbers<[1], [0], [0], [1], [0, 0, 1, 1], [], []>} : vector<16x8xbf16>, vector<8x8xbf16>, vector<16x8xf32> -> vector<16x8xf32>
    %78 = vector.extract_strided_slice %25 {offsets = [0, 24], sizes = [16, 8], strides = [1, 1]} : vector<16x32xbf16> to vector<16x8xbf16>
    %79 = vector.extract_strided_slice %28 {offsets = [0, 24], sizes = [8, 8], strides = [1, 1]} : vector<8x32xbf16> to vector<8x8xbf16>
    %cst_26 = arith.constant dense<0.000000e+00> : vector<16x8xf32>
    %80 = tpu.matmul %78, %79, %cst_26 {dimension_numbers = #tpu.dot_dimension_numbers<[1], [1], [0], [0], [0, 0, 1, 0], [], []>} : vector<16x8xbf16>, vector<8x8xbf16>, vector<16x8xf32> -> vector<16x8xf32>
    %cst_27 = arith.constant dense<0xFF800000> : vector<16xf32>
    %81 = vector.multi_reduction <maximumf>, %80, %cst_27 [1] : vector<16x8xf32> to vector<16xf32>
    %82 = vector.shape_cast %81 : vector<16xf32> to vector<16x1xf32>
    %83 = vector.broadcast %82 : vector<16x1xf32> to vector<16x8xf32>
    %84 = arith.subf %80, %83 : vector<16x8xf32>
    %85 = math.exp %84 : vector<16x8xf32>
    %cst_28 = arith.constant dense<0.000000e+00> : vector<16xf32>
    %86 = vector.multi_reduction <add>, %85, %cst_28 [1] : vector<16x8xf32> to vector<16xf32>
    %87 = vector.shape_cast %86 : vector<16xf32> to vector<16x1xf32>
    %88 = tpu.reciprocal %87 : vector<16x1xf32> -> vector<16x1xf32>
    %89 = vector.broadcast %88 : vector<16x1xf32> to vector<16x8xf32>
    %90 = arith.mulf %85, %89 : vector<16x8xf32>
    %91 = arith.truncf %90 : vector<16x8xf32> to vector<16x8xbf16>
    %92 = vector.extract_strided_slice %29 {offsets = [0, 24], sizes = [8, 8], strides = [1, 1]} : vector<8x32xbf16> to vector<8x8xbf16>
    %cst_29 = arith.constant dense<0.000000e+00> : vector<16x8xf32>
    %93 = tpu.matmul %91, %92, %cst_29 {dimension_numbers = #tpu.dot_dimension_numbers<[1], [0], [0], [1], [0, 0, 1, 1], [], []>} : vector<16x8xbf16>, vector<8x8xbf16>, vector<16x8xf32> -> vector<16x8xf32>
    %94 = tpu.concatenate %45, %61, %77, %93 in 1 : vector<16x8xf32>, vector<16x8xf32>, vector<16x8xf32>, vector<16x8xf32> -> vector<16x32xf32>
    %95 = vector.extract_strided_slice %22 {offsets = [16, 0], sizes = [16, 32], strides = [1, 1]} : vector<32x32xf32> to vector<16x32xf32>
    %96 = arith.truncf %95 : vector<16x32xf32> to vector<16x32xbf16>
    %97 = vector.extract_strided_slice %23 {offsets = [8, 0], sizes = [8, 64], strides = [1, 1]} : vector<16x64xf32> to vector<8x64xf32>
    %98 = arith.truncf %97 : vector<8x64xf32> to vector<8x64xbf16>
    %99 = vector.extract_strided_slice %98 {offsets = [0, 0], sizes = [8, 32], strides = [1, 1]} : vector<8x64xbf16> to vector<8x32xbf16>
    %100 = vector.extract_strided_slice %98 {offsets = [0, 32], sizes = [8, 32], strides = [1, 1]} : vector<8x64xbf16> to vector<8x32xbf16>
    %101 = vector.extract_strided_slice %96 {offsets = [0, 0], sizes = [16, 8], strides = [1, 1]} : vector<16x32xbf16> to vector<16x8xbf16>
    %102 = vector.extract_strided_slice %99 {offsets = [0, 0], sizes = [8, 8], strides = [1, 1]} : vector<8x32xbf16> to vector<8x8xbf16>
    %cst_30 = arith.constant dense<0.000000e+00> : vector<16x8xf32>
    %103 = tpu.matmul %101, %102, %cst_30 {dimension_numbers = #tpu.dot_dimension_numbers<[1], [1], [0], [0], [0, 0, 1, 0], [], []>} : vector<16x8xbf16>, vector<8x8xbf16>, vector<16x8xf32> -> vector<16x8xf32>
    %cst_31 = arith.constant dense<0xFF800000> : vector<16xf32>
    %104 = vector.multi_reduction <maximumf>, %103, %cst_31 [1] : vector<16x8xf32> to vector<16xf32>
    %105 = vector.shape_cast %104 : vector<16xf32> to vector<16x1xf32>
    %106 = vector.broadcast %105 : vector<16x1xf32> to vector<16x8xf32>
    %107 = arith.subf %103, %106 : vector<16x8xf32>
    %108 = math.exp %107 : vector<16x8xf32>
    %cst_32 = arith.constant dense<0.000000e+00> : vector<16xf32>
    %109 = vector.multi_reduction <add>, %108, %cst_32 [1] : vector<16x8xf32> to vector<16xf32>
    %110 = vector.shape_cast %109 : vector<16xf32> to vector<16x1xf32>
    %111 = tpu.reciprocal %110 : vector<16x1xf32> -> vector<16x1xf32>
    %112 = vector.broadcast %111 : vector<16x1xf32> to vector<16x8xf32>
    %113 = arith.mulf %108, %112 : vector<16x8xf32>
    %114 = arith.truncf %113 : vector<16x8xf32> to vector<16x8xbf16>
    %115 = vector.extract_strided_slice %100 {offsets = [0, 0], sizes = [8, 8], strides = [1, 1]} : vector<8x32xbf16> to vector<8x8xbf16>
    %cst_33 = arith.constant dense<0.000000e+00> : vector<16x8xf32>
    %116 = tpu.matmul %114, %115, %cst_33 {dimension_numbers = #tpu.dot_dimension_numbers<[1], [0], [0], [1], [0, 0, 1, 1], [], []>} : vector<16x8xbf16>, vector<8x8xbf16>, vector<16x8xf32> -> vector<16x8xf32>
    %117 = vector.extract_strided_slice %96 {offsets = [0, 8], sizes = [16, 8], strides = [1, 1]} : vector<16x32xbf16> to vector<16x8xbf16>
    %118 = vector.extract_strided_slice %99 {offsets = [0, 8], sizes = [8, 8], strides = [1, 1]} : vector<8x32xbf16> to vector<8x8xbf16>
    %cst_34 = arith.constant dense<0.000000e+00> : vector<16x8xf32>
    %119 = tpu.matmul %117, %118, %cst_34 {dimension_numbers = #tpu.dot_dimension_numbers<[1], [1], [0], [0], [0, 0, 1, 0], [], []>} : vector<16x8xbf16>, vector<8x8xbf16>, vector<16x8xf32> -> vector<16x8xf32>
    %cst_35 = arith.constant dense<0xFF800000> : vector<16xf32>
    %120 = vector.multi_reduction <maximumf>, %119, %cst_35 [1] : vector<16x8xf32> to vector<16xf32>
    %121 = vector.shape_cast %120 : vector<16xf32> to vector<16x1xf32>
    %122 = vector.broadcast %121 : vector<16x1xf32> to vector<16x8xf32>
    %123 = arith.subf %119, %122 : vector<16x8xf32>
    %124 = math.exp %123 : vector<16x8xf32>
    %cst_36 = arith.constant dense<0.000000e+00> : vector<16xf32>
    %125 = vector.multi_reduction <add>, %124, %cst_36 [1] : vector<16x8xf32> to vector<16xf32>
    %126 = vector.shape_cast %125 : vector<16xf32> to vector<16x1xf32>
    %127 = tpu.reciprocal %126 : vector<16x1xf32> -> vector<16x1xf32>
    %128 = vector.broadcast %127 : vector<16x1xf32> to vector<16x8xf32>
    %129 = arith.mulf %124, %128 : vector<16x8xf32>
    %130 = arith.truncf %129 : vector<16x8xf32> to vector<16x8xbf16>
    %131 = vector.extract_strided_slice %100 {offsets = [0, 8], sizes = [8, 8], strides = [1, 1]} : vector<8x32xbf16> to vector<8x8xbf16>
    %cst_37 = arith.constant dense<0.000000e+00> : vector<16x8xf32>
    %132 = tpu.matmul %130, %131, %cst_37 {dimension_numbers = #tpu.dot_dimension_numbers<[1], [0], [0], [1], [0, 0, 1, 1], [], []>} : vector<16x8xbf16>, vector<8x8xbf16>, vector<16x8xf32> -> vector<16x8xf32>
    %133 = vector.extract_strided_slice %96 {offsets = [0, 16], sizes = [16, 8], strides = [1, 1]} : vector<16x32xbf16> to vector<16x8xbf16>
    %134 = vector.extract_strided_slice %99 {offsets = [0, 16], sizes = [8, 8], strides = [1, 1]} : vector<8x32xbf16> to vector<8x8xbf16>
    %cst_38 = arith.constant dense<0.000000e+00> : vector<16x8xf32>
    %135 = tpu.matmul %133, %134, %cst_38 {dimension_numbers = #tpu.dot_dimension_numbers<[1], [1], [0], [0], [0, 0, 1, 0], [], []>} : vector<16x8xbf16>, vector<8x8xbf16>, vector<16x8xf32> -> vector<16x8xf32>
    %cst_39 = arith.constant dense<0xFF800000> : vector<16xf32>
    %136 = vector.multi_reduction <maximumf>, %135, %cst_39 [1] : vector<16x8xf32> to vector<16xf32>
    %137 = vector.shape_cast %136 : vector<16xf32> to vector<16x1xf32>
    %138 = vector.broadcast %137 : vector<16x1xf32> to vector<16x8xf32>
    %139 = arith.subf %135, %138 : vector<16x8xf32>
    %140 = math.exp %139 : vector<16x8xf32>
    %cst_40 = arith.constant dense<0.000000e+00> : vector<16xf32>
    %141 = vector.multi_reduction <add>, %140, %cst_40 [1] : vector<16x8xf32> to vector<16xf32>
    %142 = vector.shape_cast %141 : vector<16xf32> to vector<16x1xf32>
    %143 = tpu.reciprocal %142 : vector<16x1xf32> -> vector<16x1xf32>
    %144 = vector.broadcast %143 : vector<16x1xf32> to vector<16x8xf32>
    %145 = arith.mulf %140, %144 : vector<16x8xf32>
    %146 = arith.truncf %145 : vector<16x8xf32> to vector<16x8xbf16>
    %147 = vector.extract_strided_slice %100 {offsets = [0, 16], sizes = [8, 8], strides = [1, 1]} : vector<8x32xbf16> to vector<8x8xbf16>
    %cst_41 = arith.constant dense<0.000000e+00> : vector<16x8xf32>
    %148 = tpu.matmul %146, %147, %cst_41 {dimension_numbers = #tpu.dot_dimension_numbers<[1], [0], [0], [1], [0, 0, 1, 1], [], []>} : vector<16x8xbf16>, vector<8x8xbf16>, vector<16x8xf32> -> vector<16x8xf32>
    %149 = vector.extract_strided_slice %96 {offsets = [0, 24], sizes = [16, 8], strides = [1, 1]} : vector<16x32xbf16> to vector<16x8xbf16>
    %150 = vector.extract_strided_slice %99 {offsets = [0, 24], sizes = [8, 8], strides = [1, 1]} : vector<8x32xbf16> to vector<8x8xbf16>
    %cst_42 = arith.constant dense<0.000000e+00> : vector<16x8xf32>
    %151 = tpu.matmul %149, %150, %cst_42 {dimension_numbers = #tpu.dot_dimension_numbers<[1], [1], [0], [0], [0, 0, 1, 0], [], []>} : vector<16x8xbf16>, vector<8x8xbf16>, vector<16x8xf32> -> vector<16x8xf32>
    %cst_43 = arith.constant dense<0xFF800000> : vector<16xf32>
    %152 = vector.multi_reduction <maximumf>, %151, %cst_43 [1] : vector<16x8xf32> to vector<16xf32>
    %153 = vector.shape_cast %152 : vector<16xf32> to vector<16x1xf32>
    %154 = vector.broadcast %153 : vector<16x1xf32> to vector<16x8xf32>
    %155 = arith.subf %151, %154 : vector<16x8xf32>
    %156 = math.exp %155 : vector<16x8xf32>
    %cst_44 = arith.constant dense<0.000000e+00> : vector<16xf32>
    %157 = vector.multi_reduction <add>, %156, %cst_44 [1] : vector<16x8xf32> to vector<16xf32>
    %158 = vector.shape_cast %157 : vector<16xf32> to vector<16x1xf32>
    %159 = tpu.reciprocal %158 : vector<16x1xf32> -> vector<16x1xf32>
    %160 = vector.broadcast %159 : vector<16x1xf32> to vector<16x8xf32>
    %161 = arith.mulf %156, %160 : vector<16x8xf32>
    %162 = arith.truncf %161 : vector<16x8xf32> to vector<16x8xbf16>
    %163 = vector.extract_strided_slice %100 {offsets = [0, 24], sizes = [8, 8], strides = [1, 1]} : vector<8x32xbf16> to vector<8x8xbf16>
    %cst_45 = arith.constant dense<0.000000e+00> : vector<16x8xf32>
    %164 = tpu.matmul %162, %163, %cst_45 {dimension_numbers = #tpu.dot_dimension_numbers<[1], [0], [0], [1], [0, 0, 1, 1], [], []>} : vector<16x8xbf16>, vector<8x8xbf16>, vector<16x8xf32> -> vector<16x8xf32>
    %165 = tpu.concatenate %116, %132, %148, %164 in 1 : vector<16x8xf32>, vector<16x8xf32>, vector<16x8xf32>, vector<16x8xf32> -> vector<16x32xf32>
    %166 = tpu.concatenate %94, %165 in 0 : vector<16x32xf32>, vector<16x32xf32> -> vector<32x32xf32>
    %167 = arith.truncf %166 : vector<32x32xf32> to vector<32x32xbf16>
    %c0_46 = arith.constant 0 : index
    %c0_47 = arith.constant 0 : index
    %168 = vector.load %arg5[%c0_46, %c0_47] : memref<32x32xbf16, #tpu.memory_space<vmem>>, vector<32x32xbf16>
    %cst_48 = arith.constant dense<0.000000e+00> : vector<32x32xf32>
    %169 = tpu.matmul %167, %168, %cst_48 {dimension_numbers = #tpu.dot_dimension_numbers<[1], [0], [0], [1], [0, 0, 1, 1], [], []>} : vector<32x32xbf16>, vector<32x32xbf16>, vector<32x32xf32> -> vector<32x32xf32>
    %c0_49 = arith.constant 0 : index
    %c0_50 = arith.constant 0 : index
    %170 = vector.load %arg6[%c0_49, %c0_50] : memref<1x32xf32, #tpu.memory_space<vmem>>, vector<1x32xf32>
    %171 = vector.broadcast %170 : vector<1x32xf32> to vector<32x32xf32>
    %172 = arith.addf %169, %171 : vector<32x32xf32>
    %173 = arith.truncf %172 : vector<32x32xf32> to vector<32x32xbf16>
    %174 = tpu.concatenate %14, %173 in 1 : vector<32x32xbf16>, vector<32x32xbf16> -> vector<32x64xbf16>
    %c0_51 = arith.constant 0 : index
    %c0_52 = arith.constant 0 : index
    %175 = vector.load %arg7[%c0_51, %c0_52] : memref<64x64xbf16, #tpu.memory_space<vmem>>, vector<64x64xbf16>
    %cst_53 = arith.constant dense<0.000000e+00> : vector<32x64xf32>
    %176 = tpu.matmul %174, %175, %cst_53 {dimension_numbers = #tpu.dot_dimension_numbers<[1], [0], [0], [1], [0, 0, 1, 1], [], []>} : vector<32x64xbf16>, vector<64x64xbf16>, vector<32x64xf32> -> vector<32x64xf32>
    %c0_54 = arith.constant 0 : index
    %c0_55 = arith.constant 0 : index
    %177 = vector.load %arg8[%c0_54, %c0_55] : memref<1x64xf32, #tpu.memory_space<vmem>>, vector<1x64xf32>
    %178 = vector.broadcast %177 : vector<1x64xf32> to vector<32x64xf32>
    %179 = arith.addf %176, %178 : vector<32x64xf32>
    %cst_56 = arith.constant dense<0.000000e+00> : vector<64xf32>
    %180 = vector.multi_reduction <add>, %179, %cst_56 [0] : vector<32x64xf32> to vector<64xf32>
    %181 = vector.shape_cast %180 : vector<64xf32> to vector<1x64xf32>
    %cst_57 = arith.constant 3.200000e+01 : f32
    %182 = vector.broadcast %cst_57 : f32 to vector<1x64xf32>
    %183 = arith.divf %181, %182 : vector<1x64xf32>
    %184 = vector.broadcast %183 : vector<1x64xf32> to vector<32x64xf32>
    %185 = arith.subf %179, %184 : vector<32x64xf32>
    %186 = arith.mulf %185, %185 : vector<32x64xf32>
    %cst_58 = arith.constant dense<0.000000e+00> : vector<64xf32>
    %187 = vector.multi_reduction <add>, %186, %cst_58 [0] : vector<32x64xf32> to vector<64xf32>
    %188 = vector.shape_cast %187 : vector<64xf32> to vector<1x64xf32>
    %cst_59 = arith.constant 3.200000e+01 : f32
    %189 = vector.broadcast %cst_59 : f32 to vector<1x64xf32>
    %190 = arith.divf %188, %189 : vector<1x64xf32>
    %cst_60 = arith.constant 9.99999974E-6 : f32
    %191 = vector.broadcast %cst_60 : f32 to vector<1x64xf32>
    %192 = arith.addf %190, %191 : vector<1x64xf32>
    %193 = math.rsqrt %192 : vector<1x64xf32>
    %c0_61 = arith.constant 0 : index
    %c0_62 = arith.constant 0 : index
    %194 = vector.load %arg9[%c0_61, %c0_62] : memref<2x64xf32, #tpu.memory_space<vmem>>, vector<1x64xf32>
    %195 = arith.mulf %193, %194 : vector<1x64xf32>
    %196 = vector.broadcast %195 : vector<1x64xf32> to vector<32x64xf32>
    %197 = arith.mulf %185, %196 : vector<32x64xf32>
    %c1_63 = arith.constant 1 : index
    %c0_64 = arith.constant 0 : index
    %198 = vector.load %arg9[%c1_63, %c0_64] : memref<2x64xf32, #tpu.memory_space<vmem>>, vector<1x64xf32>
    %199 = vector.broadcast %198 : vector<1x64xf32> to vector<32x64xf32>
    %200 = arith.addf %197, %199 : vector<32x64xf32>
    %cst_65 = arith.constant 0.000000e+00 : f32
    %201 = vector.broadcast %cst_65 : f32 to vector<32x64xf32>
    %202 = arith.maximumf %200, %201 : vector<32x64xf32>
    %203 = arith.truncf %202 : vector<32x64xf32> to vector<32x64xbf16>
    %c0_66 = arith.constant 0 : index
    %c0_67 = arith.constant 0 : index
    %204 = vector.load %arg10[%c0_66, %c0_67] : memref<64x32xbf16, #tpu.memory_space<vmem>>, vector<64x32xbf16>
    %cst_68 = arith.constant dense<0.000000e+00> : vector<32x32xf32>
    %205 = tpu.matmul %203, %204, %cst_68 {dimension_numbers = #tpu.dot_dimension_numbers<[1], [0], [0], [1], [0, 0, 1, 1], [], []>} : vector<32x64xbf16>, vector<64x32xbf16>, vector<32x32xf32> -> vector<32x32xf32>
    %c0_69 = arith.constant 0 : index
    %c0_70 = arith.constant 0 : index
    %206 = vector.load %arg11[%c0_69, %c0_70] : memref<1x32xf32, #tpu.memory_space<vmem>>, vector<1x32xf32>
    %207 = vector.broadcast %206 : vector<1x32xf32> to vector<32x32xf32>
    %208 = arith.addf %205, %207 : vector<32x32xf32>
    %c0_71 = arith.constant 0 : index
    %c0_72 = arith.constant 0 : index
    %c0_73 = arith.constant 0 : index
    %209 = vector.load %arg1[%c0_71, %c0_72, %c0_73] : memref<2x32x16xf32, #tpu.memory_space<vmem>>, vector<1x32x16xf32>
    %210 = vector.shape_cast %209 : vector<1x32x16xf32> to vector<32x16xf32>
    %211 = vector.extract_strided_slice %208 {offsets = [0, 0], sizes = [16, 32], strides = [1, 1]} : vector<32x32xf32> to vector<16x32xf32>
    %212 = tpu.transpose %211, [1, 0] : vector<16x32xf32> -> vector<32x16xf32>
    %213 = arith.addf %210, %212 : vector<32x16xf32>
    %c0_74 = arith.constant 0 : index
    %c0_75 = arith.constant 0 : index
    %c0_76 = arith.constant 0 : index
    %214 = vector.load %arg12[%c0_74, %c0_75, %c0_76] : memref<2x32x16xf32, #tpu.memory_space<vmem>>, vector<1x32x16xf32>
    %215 = vector.shape_cast %214 : vector<1x32x16xf32> to vector<32x16xf32>
    %216 = vector.shape_cast %213 : vector<32x16xf32> to vector<1x32x16xf32>
    tpu.vector_store %arg12[%c0_74, %c0_75, %c0_76], %216 {strides = array<i32>} : memref<2x32x16xf32, #tpu.memory_space<vmem>>, vector<1x32x16xf32>,
    %c1_77 = arith.constant 1 : index
    %c0_78 = arith.constant 0 : index
    %c0_79 = arith.constant 0 : index
    %217 = vector.load %arg1[%c1_77, %c0_78, %c0_79] : memref<2x32x16xf32, #tpu.memory_space<vmem>>, vector<1x32x16xf32>
    %218 = vector.shape_cast %217 : vector<1x32x16xf32> to vector<32x16xf32>
    %219 = vector.extract_strided_slice %208 {offsets = [16, 0], sizes = [16, 32], strides = [1, 1]} : vector<32x32xf32> to vector<16x32xf32>
    %220 = tpu.transpose %219, [1, 0] : vector<16x32xf32> -> vector<32x16xf32>
    %221 = arith.addf %218, %220 : vector<32x16xf32>
    %c1_80 = arith.constant 1 : index
    %c0_81 = arith.constant 0 : index
    %c0_82 = arith.constant 0 : index
    %222 = vector.load %arg12[%c1_80, %c0_81, %c0_82] : memref<2x32x16xf32, #tpu.memory_space<vmem>>, vector<1x32x16xf32>
    %223 = vector.shape_cast %222 : vector<1x32x16xf32> to vector<32x16xf32>
    %224 = vector.shape_cast %221 : vector<32x16xf32> to vector<1x32x16xf32>
    tpu.vector_store %arg12[%c1_80, %c0_81, %c0_82], %224 {strides = array<i32>} : memref<2x32x16xf32, #tpu.memory_space<vmem>>, vector<1x32x16xf32>,
    return
  }
  func.func @transform_0(%arg0: i32) -> (i32, i32, i32) {
    %c0_i32 = arith.constant 0 : i32
    %c0_i32_0 = arith.constant 0 : i32
    %c0_i32_1 = arith.constant 0 : i32
    %c0_i32_2 = arith.constant 0 : i32
    return %c0_i32, %c0_i32_0, %c0_i32_1 : i32, i32, i32
  }
  func.func @transform_1(%arg0: i32) -> (i32, i32, i32) {
    %c0_i32 = arith.constant 0 : i32
    %c0_i32_0 = arith.constant 0 : i32
    %c0_i32_1 = arith.constant 0 : i32
    %c0_i32_2 = arith.constant 0 : i32
    return %c0_i32, %c0_i32_0, %c0_i32_1 : i32, i32, i32
  }
  func.func @transform_2(%arg0: i32) -> (i32, i32) {
    %c0_i32 = arith.constant 0 : i32
    %c0_i32_0 = arith.constant 0 : i32
    %c0_i32_1 = arith.constant 0 : i32
    return %c0_i32, %c0_i32_0 : i32, i32
  }
  func.func @transform_3(%arg0: i32) -> (i32, i32) {
    %c0_i32 = arith.constant 0 : i32
    %c0_i32_0 = arith.constant 0 : i32
    %c0_i32_1 = arith.constant 0 : i32
    return %c0_i32, %c0_i32_0 : i32, i32
  }
  func.func @transform_4(%arg0: i32) -> (i32, i32) {
    %c0_i32 = arith.constant 0 : i32
    %c0_i32_0 = arith.constant 0 : i32
    %c0_i32_1 = arith.constant 0 : i32
    return %c0_i32, %c0_i32_0 : i32, i32
  }
  func.func @transform_5(%arg0: i32) -> (i32, i32) {
    %c0_i32 = arith.constant 0 : i32
    %c0_i32_0 = arith.constant 0 : i32
    %c0_i32_1 = arith.constant 0 : i32
    return %c0_i32, %c0_i32_0 : i32, i32
  }
  func.func @transform_6(%arg0: i32) -> (i32, i32) {
    %c0_i32 = arith.constant 0 : i32
    %c0_i32_0 = arith.constant 0 : i32
    %c0_i32_1 = arith.constant 0 : i32
    return %c0_i32, %c0_i32_0 : i32, i32
  }
  func.func @transform_7(%arg0: i32) -> (i32, i32) {
    %c0_i32 = arith.constant 0 : i32
    %c0_i32_0 = arith.constant 0 : i32
    %c0_i32_1 = arith.constant 0 : i32
    return %c0_i32, %c0_i32_0 : i32, i32
  }
  func.func @transform_8(%arg0: i32) -> (i32, i32) {
    %c0_i32 = arith.constant 0 : i32
    %c0_i32_0 = arith.constant 0 : i32
    %c0_i32_1 = arith.constant 0 : i32
    return %c0_i32, %c0_i32_0 : i32, i32
  }
  func.func @transform_9(%arg0: i32) -> (i32, i32) {
    %c0_i32 = arith.constant 0 : i32
    %c0_i32_0 = arith.constant 0 : i32
    %c0_i32_1 = arith.constant 0 : i32
    return %c0_i32, %c0_i32_0 : i32, i32
  }
  func.func @transform_10(%arg0: i32) -> (i32, i32) {
    %c0_i32 = arith.constant 0 : i32
    %c0_i32_0 = arith.constant 0 : i32
    %c0_i32_1 = arith.constant 0 : i32
    return %c0_i32, %c0_i32_0 : i32, i32
  }
  func.func @transform_11(%arg0: i32) -> (i32, i32, i32) {
    %c0_i32 = arith.constant 0 : i32
    %c0_i32_0 = arith.constant 0 : i32
    %c0_i32_1 = arith.constant 0 : i32
    %c0_i32_2 = arith.constant 0 : i32
    return %c0_i32, %c0_i32_0, %c0_i32_1 : i32, i32, i32
  }
}

</mosaic_0001>

<llo_original>
// kernel: tpu_custom_call.1
$region0: #{tpu_custom_call.1}
  #allocation0 [shape = 'u32[]', space=smem, size = 0x4, offset = 0x4, fixed_abs, tag = 'smem constant byte address 0x4 - core index']
  #allocation1 [shape = 'u32[144,128]{1,0:T(1,128)}', space=vmem, size = 0x12000, scoped, tag = 'internal scratch']
  %s0 = inlined_call_operand.vmem [shape: f32[2,32,16], index: 0, kind: input, shape index: {}]
  %s1 = inlined_call_operand.vmem [shape: f32[2,32,8], index: 1, kind: input, shape index: {}]
  %s2 = inlined_call_operand.vmem [shape: bf16[32,96], index: 2, kind: input, shape index: {}]
  %s3 = inlined_call_operand.vmem [shape: f32[1,96], index: 3, kind: input, shape index: {}]
  %s4 = inlined_call_operand.vmem [shape: bf16[32,32], index: 4, kind: input, shape index: {}]
  %s5 = inlined_call_operand.vmem [shape: f32[1,32], index: 5, kind: input, shape index: {}]
  %s6 = inlined_call_operand.vmem [shape: bf16[64,64], index: 6, kind: input, shape index: {}]
  %s7 = inlined_call_operand.vmem [shape: f32[1,64], index: 7, kind: input, shape index: {}]
  %s8 = inlined_call_operand.vmem [shape: f32[2,64], index: 8, kind: input, shape index: {}]
  %s9 = inlined_call_operand.vmem [shape: bf16[64,32], index: 9, kind: input, shape index: {}]
  %s10 = inlined_call_operand.vmem [shape: f32[1,32], index: 10, kind: input, shape index: {}]
  %s11 = inlined_call_operand.vmem [shape: f32[2,32,16], index: 11, kind: output, shape index: {}]
  %s12 = sld [smem:[#allocation0]]
  $region54: #{tpu_custom_call.1} parent=0
    _
  %s14 = ssub.s32 1, %s12
  %s15 = scalar_select 0, %s14, %s12
  // Predicated region
  $region2: #{tpu_custom_call.1} parent=0 // pred_check
    _
  $region3: #{tpu_custom_call.1} parent=0 // pred_check_branch
    %17 = sbr.rel (0) target = $region5
  $region4: #{tpu_custom_call.1} parent=0 // pred_region
    _
  $region5: #{tpu_custom_call.1} parent=0 // pred_fallthru
    _
  // Predicated region
  $region6: #{tpu_custom_call.1} parent=0 // pred_check
    _
  $region7: #{tpu_custom_call.1} parent=0 // pred_check_branch
    %19 = sbr.rel (0) target = $region9
  $region8: #{tpu_custom_call.1} parent=0 // pred_region
    _
  $region9: #{tpu_custom_call.1} parent=0 // pred_fallthru
    _
  // Predicated region
  $region10: #{tpu_custom_call.1} parent=0 // pred_check
    _
  $region11: #{tpu_custom_call.1} parent=0 // pred_check_branch
    %21 = sbr.rel (0) target = $region13
  $region12: #{tpu_custom_call.1} parent=0 // pred_region
    _
  $region13: #{tpu_custom_call.1} parent=0 // pred_fallthru
    _
  // Predicated region
  $region14: #{tpu_custom_call.1} parent=0 // pred_check
    _
  $region15: #{tpu_custom_call.1} parent=0 // pred_check_branch
    %23 = sbr.rel (0) target = $region17
  $region16: #{tpu_custom_call.1} parent=0 // pred_region
    _
  $region17: #{tpu_custom_call.1} parent=0 // pred_fallthru
    _
  // Predicated region
  $region18: #{tpu_custom_call.1} parent=0 // pred_check
    _
  $region19: #{tpu_custom_call.1} parent=0 // pred_check_branch
    %25 = sbr.rel (0) target = $region21
  $region20: #{tpu_custom_call.1} parent=0 // pred_region
    _
  $region21: #{tpu_custom_call.1} parent=0 // pred_fallthru
    _
  // Predicated region
  $region22: #{tpu_custom_call.1} parent=0 // pred_check
    _
  $region23: #{tpu_custom_call.1} parent=0 // pred_check_branch
    %27 = sbr.rel (0) target = $region25
  $region24: #{tpu_custom_call.1} parent=0 // pred_region
    _
  $region25: #{tpu_custom_call.1} parent=0 // pred_fallthru
    _
  // Predicated region
  $region26: #{tpu_custom_call.1} parent=0 // pred_check
    _
  $region27: #{tpu_custom_call.1} parent=0 // pred_check_branch
    %29 = sbr.rel (0) target = $region29
  $region28: #{tpu_custom_call.1} parent=0 // pred_region
    _
  $region29: #{tpu_custom_call.1} parent=0 // pred_fallthru
    _
  // Predicated region
  $region30: #{tpu_custom_call.1} parent=0 // pred_check
    _
  $region31: #{tpu_custom_call.1} parent=0 // pred_check_branch
    %31 = sbr.rel (0) target = $region33
  $region32: #{tpu_custom_call.1} parent=0 // pred_region
    _
  $region33: #{tpu_custom_call.1} parent=0 // pred_fallthru
    _
  // Predicated region
  $region34: #{tpu_custom_call.1} parent=0 // pred_check
    _
  $region35: #{tpu_custom_call.1} parent=0 // pred_check_branch
    %33 = sbr.rel (0) target = $region37
  $region36: #{tpu_custom_call.1} parent=0 // pred_region
    _
  $region37: #{tpu_custom_call.1} parent=0 // pred_fallthru
    _
  // Predicated region
  $region38: #{tpu_custom_call.1} parent=0 // pred_check
    _
  $region39: #{tpu_custom_call.1} parent=0 // pred_check_branch
    %35 = sbr.rel (0) target = $region41
  $region40: #{tpu_custom_call.1} parent=0 // pred_region
    _
  $region41: #{tpu_custom_call.1} parent=0 // pred_fallthru
    _
  // Predicated region
  $region42: #{tpu_custom_call.1} parent=0 // pred_check
    _
  $region43: #{tpu_custom_call.1} parent=0 // pred_check_branch
    %37 = sbr.rel (0) target = $region45
  $region44: #{tpu_custom_call.1} parent=0 // pred_region
    _
  $region45: #{tpu_custom_call.1} parent=0 // pred_fallthru
    _
  %v39 = vld [vmem:[%s0] sm:$0xff]
  %v40 = vld [vmem:[%s0 + $0x8] sm:$0xff]
  %v41 = vld [vmem:[%s0 + $0x10] sm:$0xff]
  %v42 = vld [vmem:[%s0 + $0x18] sm:$0xff]
  %43 = vxpose.xlu0.b32.start [1/16] %v39, 128
  %44 = vxpose.xlu0.b32.cont [2/16] %v40, 128
  %45 = vxpose.xlu0.b32.cont [3/16] %v41, 128
  %46 = vxpose.xlu0.b32.cont [4/16] %v42, 128
  %47 = vxpose.xlu0.b32.cont [5/16] 0.0, 128
  %48 = vxpose.xlu0.b32.cont [6/16] 0.0, 128
  %49 = vxpose.xlu0.b32.cont [7/16] 0.0, 128
  %50 = vxpose.xlu0.b32.cont [8/16] 0.0, 128
  %51 = vxpose.xlu0.b32.cont [9/16] 0.0, 128
  %52 = vxpose.xlu0.b32.cont [10/16] 0.0, 128
  %53 = vxpose.xlu0.b32.cont [11/16] 0.0, 128
  %54 = vxpose.xlu0.b32.cont [12/16] 0.0, 128
  %55 = vxpose.xlu0.b32.cont [13/16] 0.0, 128
  %56 = vxpose.xlu0.b32.cont [14/16] 0.0, 128
  %57 = vxpose.xlu0.b32.cont [15/16] 0.0, 128
  %58 = vxpose.xlu0.b32.end [16/16] 0.0, 128
  %v59 = vpop.trf.xlu0
  %v60 = vpop.trf.xlu0
  %v61 = vpop.trf.xlu0
  %v62 = vpop.trf.xlu0
  %v63 = vpop.trf.xlu0
  %v64 = vpop.trf.xlu0
  %v65 = vpop.trf.xlu0
  %v66 = vpop.trf.xlu0
  %v67 = vpop.trf.xlu0
  %v68 = vpop.trf.xlu0
  %v69 = vpop.trf.xlu0
  %v70 = vpop.trf.xlu0
  %v71 = vpop.trf.xlu0
  %v72 = vpop.trf.xlu0
  %v73 = vpop.trf.xlu0
  %v74 = vpop.trf.xlu0
  %s75 = scalar_lea.vmem %s0, 32
  %v76 = vld [vmem:[%s75] sm:$0xff]
  %v77 = vld [vmem:[%s75 + $0x8] sm:$0xff]
  %v78 = vld [vmem:[%s75 + $0x10] sm:$0xff]
  %v79 = vld [vmem:[%s75 + $0x18] sm:$0xff]
  %80 = vxpose.xlu0.b32.start [1/16] %v76, 128
  %81 = vxpose.xlu0.b32.cont [2/16] %v77, 128
  %82 = vxpose.xlu0.b32.cont [3/16] %v78, 128
  %83 = vxpose.xlu0.b32.cont [4/16] %v79, 128
  %84 = vxpose.xlu0.b32.cont [5/16] 0.0, 128
  %85 = vxpose.xlu0.b32.cont [6/16] 0.0, 128
  %86 = vxpose.xlu0.b32.cont [7/16] 0.0, 128
  %87 = vxpose.xlu0.b32.cont [8/16] 0.0, 128
  %88 = vxpose.xlu0.b32.cont [9/16] 0.0, 128
  %89 = vxpose.xlu0.b32.cont [10/16] 0.0, 128
  %90 = vxpose.xlu0.b32.cont [11/16] 0.0, 128
  %91 = vxpose.xlu0.b32.cont [12/16] 0.0, 128
  %92 = vxpose.xlu0.b32.cont [13/16] 0.0, 128
  %93 = vxpose.xlu0.b32.cont [14/16] 0.0, 128
  %94 = vxpose.xlu0.b32.cont [15/16] 0.0, 128
  %95 = vxpose.xlu0.b32.end [16/16] 0.0, 128
  %v96 = vpop.trf.xlu0
  %v97 = vpop.trf.xlu0
  %v98 = vpop.trf.xlu0
  %v99 = vpop.trf.xlu0
  %v100 = vpop.trf.xlu0
  %v101 = vpop.trf.xlu0
  %v102 = vpop.trf.xlu0
  %v103 = vpop.trf.xlu0
  %v104 = vpop.trf.xlu0
  %v105 = vpop.trf.xlu0
  %v106 = vpop.trf.xlu0
  %v107 = vpop.trf.xlu0
  %v108 = vpop.trf.xlu0
  %v109 = vpop.trf.xlu0
  %v110 = vpop.trf.xlu0
  %v111 = vpop.trf.xlu0
  %v112 = vld [vmem:[%s1] sm:$0xff]
  %v113 = vld [vmem:[%s1 + $0x8] sm:$0xff]
  %v114 = vld [vmem:[%s1 + $0x10] sm:$0xff]
  %v115 = vld [vmem:[%s1 + $0x18] sm:$0xff]
  %116 = vxpose.xlu0.b32.start [1/16] %v112, 128
  %117 = vxpose.xlu0.b32.cont [2/16] %v113, 128
  %118 = vxpose.xlu0.b32.cont [3/16] %v114, 128
  %119 = vxpose.xlu0.b32.cont [4/16] %v115, 128
  %120 = vxpose.xlu0.b32.cont [5/16] 0.0, 128
  %121 = vxpose.xlu0.b32.cont [6/16] 0.0, 128
  %122 = vxpose.xlu0.b32.cont [7/16] 0.0, 128
  %123 = vxpose.xlu0.b32.cont [8/16] 0.0, 128
  %124 = vxpose.xlu0.b32.cont [9/16] 0.0, 128
  %125 = vxpose.xlu0.b32.cont [10/16] 0.0, 128
  %126 = vxpose.xlu0.b32.cont [11/16] 0.0, 128
  %127 = vxpose.xlu0.b32.cont [12/16] 0.0, 128
  %128 = vxpose.xlu0.b32.cont [13/16] 0.0, 128
  %129 = vxpose.xlu0.b32.cont [14/16] 0.0, 128
  %130 = vxpose.xlu0.b32.cont [15/16] 0.0, 128
  %131 = vxpose.xlu0.b32.end [16/16] 0.0, 128
  %v132 = vpop.trf.xlu0
  %v133 = vpop.trf.xlu0
  %v134 = vpop.trf.xlu0
  %v135 = vpop.trf.xlu0
  %v136 = vpop.trf.xlu0
  %v137 = vpop.trf.xlu0
  %v138 = vpop.trf.xlu0
  %v139 = vpop.trf.xlu0
  %v140 = vpop.trf.xlu0
  %v141 = vpop.trf.xlu0
  %v142 = vpop.trf.xlu0
  %v143 = vpop.trf.xlu0
  %v144 = vpop.trf.xlu0
  %v145 = vpop.trf.xlu0
  %v146 = vpop.trf.xlu0
  %v147 = vpop.trf.xlu0
  %s148 = scalar_lea.vmem %s1, 32
  %v149 = vld [vmem:[%s148] sm:$0xff]
  %v150 = vld [vmem:[%s148 + $0x8] sm:$0xff]
  %v151 = vld [vmem:[%s148 + $0x10] sm:$0xff]
  %v152 = vld [vmem:[%s148 + $0x18] sm:$0xff]
  %153 = vxpose.xlu0.b32.start [1/16] %v149, 128
  %154 = vxpose.xlu0.b32.cont [2/16] %v150, 128
  %155 = vxpose.xlu0.b32.cont [3/16] %v151, 128
  %156 = vxpose.xlu0.b32.cont [4/16] %v152, 128
  %157 = vxpose.xlu0.b32.cont [5/16] 0.0, 128
  %158 = vxpose.xlu0.b32.cont [6/16] 0.0, 128
  %159 = vxpose.xlu0.b32.cont [7/16] 0.0, 128
  %160 = vxpose.xlu0.b32.cont [8/16] 0.0, 128
  %161 = vxpose.xlu0.b32.cont [9/16] 0.0, 128
  %162 = vxpose.xlu0.b32.cont [10/16] 0.0, 128
  %163 = vxpose.xlu0.b32.cont [11/16] 0.0, 128
  %164 = vxpose.xlu0.b32.cont [12/16] 0.0, 128
  %165 = vxpose.xlu0.b32.cont [13/16] 0.0, 128
  %166 = vxpose.xlu0.b32.cont [14/16] 0.0, 128
  %167 = vxpose.xlu0.b32.cont [15/16] 0.0, 128
  %168 = vxpose.xlu0.b32.end [16/16] 0.0, 128
  %v169 = vpop.trf.xlu0
  %v170 = vpop.trf.xlu0
  %v171 = vpop.trf.xlu0
  %v172 = vpop.trf.xlu0
  %v173 = vpop.trf.xlu0
  %v174 = vpop.trf.xlu0
  %v175 = vpop.trf.xlu0
  %v176 = vpop.trf.xlu0
  %v177 = vpop.trf.xlu0
  %v178 = vpop.trf.xlu0
  %v179 = vpop.trf.xlu0
  %v180 = vpop.trf.xlu0
  %v181 = vpop.trf.xlu0
  %v182 = vpop.trf.xlu0
  %v183 = vpop.trf.xlu0
  %v184 = vpop.trf.xlu0
  %v185 = vpack.c.bf16 %v60, %v59
  %v186 = vpack.c.bf16 %v97, %v96
  %v187 = vpack.c.bf16 %v169, %v132
  %v188 = vld [vmem:[%s2] sm:$0xf]
  %v189 = vld [vmem:[%s2 + $0x4] sm:$0xf]
  %v190 = vld [vmem:[%s2 + $0x8] sm:$0xf]
  %v191 = vld [vmem:[%s2 + $0xc] sm:$0xf]
  %v192 = vld [vmem:[%s3] sm:$0x1]
  %v194 = vlaneseq
  %v195 = vshrl.u32 %v194, 7
  %v196 = vsub.s32 0, %v195
  %v197 = vrot.slane %v192, %v196
  %v203 = vunpack.c.l.b16 %v188
  %v204 = vunpack.c.l.b16 %v189
  %v205 = vunpack.c.l.b16 %v190
  %v206 = vunpack.c.l.b16 %v191
  %v207 = vpack.c.b16 %v204, %v203
  %v208 = vpack.c.b16 %v206, %v205
  %vm211 = vcmask 261120
  %v213 = vsel %vm211, %v185, 0
  %v216 = vsel %vm211, %v186, 0
  %v219 = vsel %vm211, %v187, 0
  %221 = vmatprep.subr.bf16.mxu0 0
  %222 = vmatpush1.bf16.msra.mxu0 %v207
  %223 = vmatprep.subr.bf16.mxu0 0
  %224 = vmatpush1.bf16.msra.mxu0 %v208
  %225 = vmatprep.subr.bf16.mxu0 0
  %226 = vmatpush1.bf16.msra.mxu0 0
  %227 = vmatprep.subr.bf16.mxu0 0
  %228 = vmatpush1.bf16.msra.mxu0 0
  %229 = vmatprep.subr.bf16.mxu0 0
  %230 = vmatpush1.bf16.msra.mxu0 0
  %231 = vmatprep.subr.bf16.mxu0 0
  %232 = vmatpush1.bf16.msra.mxu0 0
  %233 = vmatprep.subr.bf16.mxu0 0
  %234 = vmatpush1.bf16.msra.mxu0 0
  %235 = vmatprep.subr.bf16.mxu0 0
  %236 = vmatpush1.bf16.msra.mxu0 0
  %237 = vmatprep.subr.bf16.mxu0 0
  %238 = vmatpush1.bf16.msra.mxu0 0
  %239 = vmatprep.subr.bf16.mxu0 0
  %240 = vmatpush1.bf16.msra.mxu0 0
  %241 = vmatprep.subr.bf16.mxu0 0
  %242 = vmatpush1.bf16.msra.mxu0 0
  %243 = vmatprep.subr.bf16.mxu0 0
  %244 = vmatpush1.bf16.msra.mxu0 0
  %245 = vmatprep.subr.bf16.mxu0 0
  %246 = vmatpush1.bf16.msra.mxu0 0
  %247 = vmatprep.subr.bf16.mxu0 0
  %248 = vmatpush1.bf16.msra.mxu0 0
  %249 = vmatprep.subr.bf16.mxu0 0
  %250 = vmatpush1.bf16.msra.mxu0 0
  %251 = vmatprep.subr.bf16.mxu0 0
  %252 = vmatpush1.bf16.msra.mxu0 0
  %253 = vmatprep.mubr.bf16.mxu0 0
  %254 = vmatmul.mubr.bf16.gmra.mrb[0].mxu0 %v213
  %v255 = vpop.f32.mrb[0].mxu0
  %v256 = vadd.f32 %v197, %v255
  %v257 = vpop.f32.mrb[0].mxu0
  %v258 = vpop.f32.mrb[0].mxu0
  %v259 = vadd.f32 %v197, %v258
  %v260 = vpop.f32.mrb[0].mxu0
  %261 = vmatprep.mubr.bf16.mxu0 0
  %262 = vmatmul.mubr.bf16.gmra.mrb[0].mxu0 %v216
  %v263 = vpop.f32.mrb[0].mxu0
  %v264 = vadd.f32 %v197, %v263
  %v265 = vpop.f32.mrb[0].mxu0
  %v266 = vpop.f32.mrb[0].mxu0
  %v267 = vadd.f32 %v197, %v266
  %v268 = vpop.f32.mrb[0].mxu0
  %269 = vmatprep.mubr.bf16.mxu0 0
  %270 = vmatmul.mubr.bf16.gmra.mrb[0].mxu0 %v219
  %v271 = vpop.f32.mrb[0].mxu0
  %v272 = vadd.f32 %v197, %v271
  %v273 = vpop.f32.mrb[0].mxu0
  %v274 = vpop.f32.mrb[0].mxu0
  %v275 = vadd.f32 %v197, %v274
  %v276 = vpop.f32.mrb[0].mxu0
  %277 = vdwg.mxu0
  %v278 = vpack.c.bf16 %v259, %v256
  %v279 = vpack.c.bf16 %v272, %v272
  %281 = vrot.lane.b32.xlu0 %v279, 96
  %v282 = vpop.permute.xlu0 %281
  %vm283 = vcmask 64512
  %v285 = vsel %vm283, %v278, 0
  %v288 = vsel %vm283, %v282, 0
  %290 = vmatprep.subr.bf16.mxu0 0
  %291 = vmatpush1.bf16.xpose.msra.mxu0 %v288
  %292 = vmatprep.subr.bf16.mxu0 0
  %293 = vmatpush1.bf16.xpose.msra.mxu0 0
  %294 = vmatprep.subr.bf16.mxu0 0
  %295 = vmatpush1.bf16.xpose.msra.mxu0 0
  %296 = vmatprep.subr.bf16.mxu0 0
  %297 = vmatpush1.bf16.xpose.msra.mxu0 0
  %298 = vmatprep.subr.bf16.mxu0 0
  %299 = vmatpush1.bf16.xpose.msra.mxu0 0
  %300 = vmatprep.subr.bf16.mxu0 0
  %301 = vmatpush1.bf16.xpose.msra.mxu0 0
  %302 = vmatprep.subr.bf16.mxu0 0
  %303 = vmatpush1.bf16.xpose.msra.mxu0 0
  %304 = vmatprep.subr.bf16.mxu0 0
  %305 = vmatpush1.bf16.xpose.msra.mxu0 0
  %306 = vmatprep.subr.bf16.mxu0 0
  %307 = vmatpush1.bf16.xpose.msra.mxu0 0
  %308 = vmatprep.subr.bf16.mxu0 0
  %309 = vmatpush1.bf16.xpose.msra.mxu0 0
  %310 = vmatprep.subr.bf16.mxu0 0
  %311 = vmatpush1.bf16.xpose.msra.mxu0 0
  %312 = vmatprep.subr.bf16.mxu0 0
  %313 = vmatpush1.bf16.xpose.msra.mxu0 0
  %314 = vmatprep.subr.bf16.mxu0 0
  %315 = vmatpush1.bf16.xpose.msra.mxu0 0
  %316 = vmatprep.subr.bf16.mxu0 0
  %317 = vmatpush1.bf16.xpose.msra.mxu0 0
  %318 = vmatprep.subr.bf16.mxu0 0
  %319 = vmatpush1.bf16.xpose.msra.mxu0 0
  %320 = vmatprep.subr.bf16.mxu0 0
  %321 = vmatpush1.bf16.xpose.msra.mxu0 0
  %322 = vmatprep.mubr.bf16.mxu0 0
  %323 = vmatmul.mubr.bf16.gmra.mrb[0].mxu0 %v285
  %v324 = vpop.f32.mrb[0].mxu0
  %v325 = vadd.f32 0.0, %v324
  %v326 = vpop.f32.mrb[0].mxu0
  %v327 = vpop.f32.mrb[0].mxu0
  %v328 = vadd.f32 0.0, %v327
  %v329 = vpop.f32.mrb[0].mxu0
  %330 = vdwg.mxu0
  %v331 = vsel %vm283, %v325, -inf
  %332 = vmax.xlane.f32.xlu0 %v331
  %v333 = vpop.xlane.xlu0 %332
  %v334 = vsel %vm283, %v328, -inf
  %335 = vmax.xlane.f32.xlu0 %v334
  %v336 = vpop.xlane.xlu0 %335
  %v337 = vsub.f32 %v325, %v333
  %v338 = vsub.f32 %v328, %v336
  %v339 = vmul.f32 %v337, 1.442695
  %v340 = vpow.pop %v339
  %v341 = vmul.f32 %v338, 1.442695
  %v342 = vpow.pop %v341
  %v343 = vsel %vm283, %v340, 0.0
  %344 = vadd.xlane.f32.xlu0 %v343
  %v345 = vpop.xlane.xlu0 %344
  %v346 = vsel %vm283, %v342, 0.0
  %347 = vadd.xlane.f32.xlu0 %v346
  %v348 = vpop.xlane.xlu0 %347
  %v349 = vrcp.pop %v345
  %v350 = vrcp.pop %v348
  %v351 = vmul.f32 %v340, %v349
  %v352 = vmul.f32 %v342, %v350
  %v353 = vpack.c.bf16 %v352, %v351
  %354 = vrot.lane.b32.xlu0 %v279, 64
  %v355 = vpop.permute.xlu0 %354
  %v357 = vsel %vm283, %v353, 0
  %vm359 = vcmask 1043456
  %v361 = vsel %vm359, %v355, 0
  %363 = vmatprep.subr.bf16.mxu0 0
  %364 = vmatpush1.bf16.msra.mxu0 %v361
  %365 = vmatprep.subr.bf16.mxu0 0
  %366 = vmatpush1.bf16.msra.mxu0 0
  %367 = vmatprep.subr.bf16.mxu0 0
  %368 = vmatpush1.bf16.msra.mxu0 0
  %369 = vmatprep.subr.bf16.mxu0 0
  %370 = vmatpush1.bf16.msra.mxu0 0
  %371 = vmatprep.subr.bf16.mxu0 0
  %372 = vmatpush1.bf16.msra.mxu0 0
  %373 = vmatprep.subr.bf16.mxu0 0
  %374 = vmatpush1.bf16.msra.mxu0 0
  %375 = vmatprep.subr.bf16.mxu0 0
  %376 = vmatpush1.bf16.msra.mxu0 0
  %377 = vmatprep.subr.bf16.mxu0 0
  %378 = vmatpush1.bf16.msra.mxu0 0
  %379 = vmatprep.subr.bf16.mxu0 0
  %380 = vmatpush1.bf16.msra.mxu0 0
  %381 = vmatprep.subr.bf16.mxu0 0
  %382 = vmatpush1.bf16.msra.mxu0 0
  %383 = vmatprep.subr.bf16.mxu0 0
  %384 = vmatpush1.bf16.msra.mxu0 0
  %385 = vmatprep.subr.bf16.mxu0 0
  %386 = vmatpush1.bf16.msra.mxu0 0
  %387 = vmatprep.subr.bf16.mxu0 0
  %388 = vmatpush1.bf16.msra.mxu0 0
  %389 = vmatprep.subr.bf16.mxu0 0
  %390 = vmatpush1.bf16.msra.mxu0 0
  %391 = vmatprep.subr.bf16.mxu0 0
  %392 = vmatpush1.bf16.msra.mxu0 0
  %393 = vmatprep.subr.bf16.mxu0 0
  %394 = vmatpush1.bf16.msra.mxu0 0
  %395 = vmatprep.mubr.bf16.mxu0 0
  %396 = vmatmul.mubr.bf16.gmra.mrb[0].mxu0 %v357
  %v397 = vpop.f32.mrb[0].mxu0
  %v398 = vadd.f32 0.0, %v397
  %v399 = vpop.f32.mrb[0].mxu0
  %v400 = vpop.f32.mrb[0].mxu0
  %v401 = vadd.f32 0.0, %v400
  %v402 = vpop.f32.mrb[0].mxu0
  %403 = vdwg.mxu0
  %405 = vrot.lane.b32.xlu0 %v278, 120
  %v406 = vpop.permute.xlu0 %405
  %407 = vrot.lane.b32.xlu0 %v279, 88
  %v408 = vpop.permute.xlu0 %407
  %v410 = vsel %vm283, %v406, 0
  %v413 = vsel %vm283, %v408, 0
  %415 = vmatprep.subr.bf16.mxu0 0
  %416 = vmatpush1.bf16.xpose.msra.mxu0 %v413
  %417 = vmatprep.subr.bf16.mxu0 0
  %418 = vmatpush1.bf16.xpose.msra.mxu0 0
  %419 = vmatprep.subr.bf16.mxu0 0
  %420 = vmatpush1.bf16.xpose.msra.mxu0 0
  %421 = vmatprep.subr.bf16.mxu0 0
  %422 = vmatpush1.bf16.xpose.msra.mxu0 0
  %423 = vmatprep.subr.bf16.mxu0 0
  %424 = vmatpush1.bf16.xpose.msra.mxu0 0
  %425 = vmatprep.subr.bf16.mxu0 0
  %426 = vmatpush1.bf16.xpose.msra.mxu0 0
  %427 = vmatprep.subr.bf16.mxu0 0
  %428 = vmatpush1.bf16.xpose.msra.mxu0 0
  %429 = vmatprep.subr.bf16.mxu0 0
  %430 = vmatpush1.bf16.xpose.msra.mxu0 0
  %431 = vmatprep.subr.bf16.mxu0 0
  %432 = vmatpush1.bf16.xpose.msra.mxu0 0
  %433 = vmatprep.subr.bf16.mxu0 0
  %434 = vmatpush1.bf16.xpose.msra.mxu0 0
  %435 = vmatprep.subr.bf16.mxu0 0
  %436 = vmatpush1.bf16.xpose.msra.mxu0 0
  %437 = vmatprep.subr.bf16.mxu0 0
  %438 = vmatpush1.bf16.xpose.msra.mxu0 0
  %439 = vmatprep.subr.bf16.mxu0 0
  %440 = vmatpush1.bf16.xpose.msra.mxu0 0
  %441 = vmatprep.subr.bf16.mxu0 0
  %442 = vmatpush1.bf16.xpose.msra.mxu0 0
  %443 = vmatprep.subr.bf16.mxu0 0
  %444 = vmatpush1.bf16.xpose.msra.mxu0 0
  %445 = vmatprep.subr.bf16.mxu0 0
  %446 = vmatpush1.bf16.xpose.msra.mxu0 0
  %447 = vmatprep.mubr.bf16.mxu0 0
  %448 = vmatmul.mubr.bf16.gmra.mrb[0].mxu0 %v410
  %v449 = vpop.f32.mrb[0].mxu0
  %v450 = vadd.f32 0.0, %v449
  %v451 = vpop.f32.mrb[0].mxu0
  %v452 = vpop.f32.mrb[0].mxu0
  %v453 = vadd.f32 0.0, %v452
  %v454 = vpop.f32.mrb[0].mxu0
  %455 = vdwg.mxu0
  %v456 = vsel %vm283, %v450, -inf
  %457 = vmax.xlane.f32.xlu0 %v456
  %v458 = vpop.xlane.xlu0 %457
  %v459 = vsel %vm283, %v453, -inf
  %460 = vmax.xlane.f32.xlu0 %v459
  %v461 = vpop.xlane.xlu0 %460
  %v462 = vsub.f32 %v450, %v458
  %v463 = vsub.f32 %v453, %v461
  %v464 = vmul.f32 %v462, 1.442695
  %v465 = vpow.pop %v464
  %v466 = vmul.f32 %v463, 1.442695
  %v467 = vpow.pop %v466
  %v468 = vsel %vm283, %v465, 0.0
  %469 = vadd.xlane.f32.xlu0 %v468
  %v470 = vpop.xlane.xlu0 %469
  %v471 = vsel %vm283, %v467, 0.0
  %472 = vadd.xlane.f32.xlu0 %v471
  %v473 = vpop.xlane.xlu0 %472
  %v474 = vrcp.pop %v470
  %v475 = vrcp.pop %v473
  %v476 = vmul.f32 %v465, %v474
  %v477 = vmul.f32 %v467, %v475
  %v478 = vpack.c.bf16 %v477, %v476
  %479 = vrot.lane.b32.xlu0 %v279, 56
  %v480 = vpop.permute.xlu0 %479
  %v482 = vsel %vm283, %v478, 0
  %v485 = vsel %vm359, %v480, 0
  %487 = vmatprep.subr.bf16.mxu0 0
  %488 = vmatpush1.bf16.msra.mxu0 %v485
  %489 = vmatprep.subr.bf16.mxu0 0
  %490 = vmatpush1.bf16.msra.mxu0 0
  %491 = vmatprep.subr.bf16.mxu0 0
  %492 = vmatpush1.bf16.msra.mxu0 0
  %493 = vmatprep.subr.bf16.mxu0 0
  %494 = vmatpush1.bf16.msra.mxu0 0
  %495 = vmatprep.subr.bf16.mxu0 0
  %496 = vmatpush1.bf16.msra.mxu0 0
  %497 = vmatprep.subr.bf16.mxu0 0
  %498 = vmatpush1.bf16.msra.mxu0 0
  %499 = vmatprep.subr.bf16.mxu0 0
  %500 = vmatpush1.bf16.msra.mxu0 0
  %501 = vmatprep.subr.bf16.mxu0 0
  %502 = vmatpush1.bf16.msra.mxu0 0
  %503 = vmatprep.subr.bf16.mxu0 0
  %504 = vmatpush1.bf16.msra.mxu0 0
  %505 = vmatprep.subr.bf16.mxu0 0
  %506 = vmatpush1.bf16.msra.mxu0 0
  %507 = vmatprep.subr.bf16.mxu0 0
  %508 = vmatpush1.bf16.msra.mxu0 0
  %509 = vmatprep.subr.bf16.mxu0 0
  %510 = vmatpush1.bf16.msra.mxu0 0
  %511 = vmatprep.subr.bf16.mxu0 0
  %512 = vmatpush1.bf16.msra.mxu0 0
  %513 = vmatprep.subr.bf16.mxu0 0
  %514 = vmatpush1.bf16.msra.mxu0 0
  %515 = vmatprep.subr.bf16.mxu0 0
  %516 = vmatpush1.bf16.msra.mxu0 0
  %517 = vmatprep.subr.bf16.mxu0 0
  %518 = vmatpush1.bf16.msra.mxu0 0
  %519 = vmatprep.mubr.bf16.mxu0 0
  %520 = vmatmul.mubr.bf16.gmra.mrb[0].mxu0 %v482
  %v521 = vpop.f32.mrb[0].mxu0
  %v522 = vadd.f32 0.0, %v521
  %v523 = vpop.f32.mrb[0].mxu0
  %v524 = vpop.f32.mrb[0].mxu0
  %v525 = vadd.f32 0.0, %v524
  %v526 = vpop.f32.mrb[0].mxu0
  %527 = vdwg.mxu0
  %528 = vrot.lane.b32.xlu0 %v278, 112
  %v529 = vpop.permute.xlu0 %528
  %530 = vrot.lane.b32.xlu0 %v279, 80
  %v531 = vpop.permute.xlu0 %530
  %v533 = vsel %vm283, %v529, 0
  %v536 = vsel %vm283, %v531, 0
  %538 = vmatprep.subr.bf16.mxu0 0
  %539 = vmatpush1.bf16.xpose.msra.mxu0 %v536
  %540 = vmatprep.subr.bf16.mxu0 0
  %541 = vmatpush1.bf16.xpose.msra.mxu0 0
  %542 = vmatprep.subr.bf16.mxu0 0
  %543 = vmatpush1.bf16.xpose.msra.mxu0 0
  %544 = vmatprep.subr.bf16.mxu0 0
  %545 = vmatpush1.bf16.xpose.msra.mxu0 0
  %546 = vmatprep.subr.bf16.mxu0 0
  %547 = vmatpush1.bf16.xpose.msra.mxu0 0
  %548 = vmatprep.subr.bf16.mxu0 0
  %549 = vmatpush1.bf16.xpose.msra.mxu0 0
  %550 = vmatprep.subr.bf16.mxu0 0
  %551 = vmatpush1.bf16.xpose.msra.mxu0 0
  %552 = vmatprep.subr.bf16.mxu0 0
  %553 = vmatpush1.bf16.xpose.msra.mxu0 0
  %554 = vmatprep.subr.bf16.mxu0 0
  %555 = vmatpush1.bf16.xpose.msra.mxu0 0
  %556 = vmatprep.subr.bf16.mxu0 0
  %557 = vmatpush1.bf16.xpose.msra.mxu0 0
  %558 = vmatprep.subr.bf16.mxu0 0
  %559 = vmatpush1.bf16.xpose.msra.mxu0 0
  %560 = vmatprep.subr.bf16.mxu0 0
  %561 = vmatpush1.bf16.xpose.msra.mxu0 0
  %562 = vmatprep.subr.bf16.mxu0 0
  %563 = vmatpush1.bf16.xpose.msra.mxu0 0
  %564 = vmatprep.subr.bf16.mxu0 0
  %565 = vmatpush1.bf16.xpose.msra.mxu0 0
  %566 = vmatprep.subr.bf16.mxu0 0
  %567 = vmatpush1.bf16.xpose.msra.mxu0 0
  %568 = vmatprep.subr.bf16.mxu0 0
  %569 = vmatpush1.bf16.xpose.msra.mxu0 0
  %570 = vmatprep.mubr.bf16.mxu0 0
  %571 = vmatmul.mubr.bf16.gmra.mrb[0].mxu0 %v533
  %v572 = vpop.f32.mrb[0].mxu0
  %v573 = vadd.f32 0.0, %v572
  %v574 = vpop.f32.mrb[0].mxu0
  %v575 = vpop.f32.mrb[0].mxu0
  %v576 = vadd.f32 0.0, %v575
  %v577 = vpop.f32.mrb[0].mxu0
  %578 = vdwg.mxu0
  %v579 = vsel %vm283, %v573, -inf
  %580 = vmax.xlane.f32.xlu0 %v579
  %v581 = vpop.xlane.xlu0 %580
  %v582 = vsel %vm283, %v576, -inf
  %583 = vmax.xlane.f32.xlu0 %v582
  %v584 = vpop.xlane.xlu0 %583
  %v585 = vsub.f32 %v573, %v581
  %v586 = vsub.f32 %v576, %v584
  %v587 = vmul.f32 %v585, 1.442695
  %v588 = vpow.pop %v587
  %v589 = vmul.f32 %v586, 1.442695
  %v590 = vpow.pop %v589
  %v591 = vsel %vm283, %v588, 0.0
  %592 = vadd.xlane.f32.xlu0 %v591
  %v593 = vpop.xlane.xlu0 %592
  %v594 = vsel %vm283, %v590, 0.0
  %595 = vadd.xlane.f32.xlu0 %v594
  %v596 = vpop.xlane.xlu0 %595
  %v597 = vrcp.pop %v593
  %v598 = vrcp.pop %v596
  %v599 = vmul.f32 %v588, %v597
  %v600 = vmul.f32 %v590, %v598
  %v601 = vpack.c.bf16 %v600, %v599
  %602 = vrot.lane.b32.xlu0 %v279, 48
  %v603 = vpop.permute.xlu0 %602
  %v605 = vsel %vm283, %v601, 0
  %v608 = vsel %vm359, %v603, 0
  %610 = vmatprep.subr.bf16.mxu0 0
  %611 = vmatpush1.bf16.msra.mxu0 %v608
  %612 = vmatprep.subr.bf16.mxu0 0
  %613 = vmatpush1.bf16.msra.mxu0 0
  %614 = vmatprep.subr.bf16.mxu0 0
  %615 = vmatpush1.bf16.msra.mxu0 0
  %616 = vmatprep.subr.bf16.mxu0 0
  %617 = vmatpush1.bf16.msra.mxu0 0
  %618 = vmatprep.subr.bf16.mxu0 0
  %619 = vmatpush1.bf16.msra.mxu0 0
  %620 = vmatprep.subr.bf16.mxu0 0
  %621 = vmatpush1.bf16.msra.mxu0 0
  %622 = vmatprep.subr.bf16.mxu0 0
  %623 = vmatpush1.bf16.msra.mxu0 0
  %624 = vmatprep.subr.bf16.mxu0 0
  %625 = vmatpush1.bf16.msra.mxu0 0
  %626 = vmatprep.subr.bf16.mxu0 0
  %627 = vmatpush1.bf16.msra.mxu0 0
  %628 = vmatprep.subr.bf16.mxu0 0
  %629 = vmatpush1.bf16.msra.mxu0 0
  %630 = vmatprep.subr.bf16.mxu0 0
  %631 = vmatpush1.bf16.msra.mxu0 0
  %632 = vmatprep.subr.bf16.mxu0 0
  %633 = vmatpush1.bf16.msra.mxu0 0
  %634 = vmatprep.subr.bf16.mxu0 0
  %635 = vmatpush1.bf16.msra.mxu0 0
  %636 = vmatprep.subr.bf16.mxu0 0
  %637 = vmatpush1.bf16.msra.mxu0 0
  %638 = vmatprep.subr.bf16.mxu0 0
  %639 = vmatpush1.bf16.msra.mxu0 0
  %640 = vmatprep.subr.bf16.mxu0 0
  %641 = vmatpush1.bf16.msra.mxu0 0
  %642 = vmatprep.mubr.bf16.mxu0 0
  %643 = vmatmul.mubr.bf16.gmra.mrb[0].mxu0 %v605
  %v644 = vpop.f32.mrb[0].mxu0
  %v645 = vadd.f32 0.0, %v644
  %v646 = vpop.f32.mrb[0].mxu0
  %v647 = vpop.f32.mrb[0].mxu0
  %v648 = vadd.f32 0.0, %v647
  %v649 = vpop.f32.mrb[0].mxu0
  %650 = vdwg.mxu0
  %651 = vrot.lane.b32.xlu0 %v278, 104
  %v652 = vpop.permute.xlu0 %651
  %653 = vrot.lane.b32.xlu0 %v279, 72
  %v654 = vpop.permute.xlu0 %653
  %v656 = vsel %vm283, %v652, 0
  %v659 = vsel %vm283, %v654, 0
  %661 = vmatprep.subr.bf16.mxu0 0
  %662 = vmatpush1.bf16.xpose.msra.mxu0 %v659
  %663 = vmatprep.subr.bf16.mxu0 0
  %664 = vmatpush1.bf16.xpose.msra.mxu0 0
  %665 = vmatprep.subr.bf16.mxu0 0
  %666 = vmatpush1.bf16.xpose.msra.mxu0 0
  %667 = vmatprep.subr.bf16.mxu0 0
  %668 = vmatpush1.bf16.xpose.msra.mxu0 0
  %669 = vmatprep.subr.bf16.mxu0 0
  %670 = vmatpush1.bf16.xpose.msra.mxu0 0
  %671 = vmatprep.subr.bf16.mxu0 0
  %672 = vmatpush1.bf16.xpose.msra.mxu0 0
  %673 = vmatprep.subr.bf16.mxu0 0
  %674 = vmatpush1.bf16.xpose.msra.mxu0 0
  %675 = vmatprep.subr.bf16.mxu0 0
  %676 = vmatpush1.bf16.xpose.msra.mxu0 0
  %677 = vmatprep.subr.bf16.mxu0 0
  %678 = vmatpush1.bf16.xpose.msra.mxu0 0
  %679 = vmatprep.subr.bf16.mxu0 0
  %680 = vmatpush1.bf16.xpose.msra.mxu0 0
  %681 = vmatprep.subr.bf16.mxu0 0
  %682 = vmatpush1.bf16.xpose.msra.mxu0 0
  %683 = vmatprep.subr.bf16.mxu0 0
  %684 = vmatpush1.bf16.xpose.msra.mxu0 0
  %685 = vmatprep.subr.bf16.mxu0 0
  %686 = vmatpush1.bf16.xpose.msra.mxu0 0
  %687 = vmatprep.subr.bf16.mxu0 0
  %688 = vmatpush1.bf16.xpose.msra.mxu0 0
  %689 = vmatprep.subr.bf16.mxu0 0
  %690 = vmatpush1.bf16.xpose.msra.mxu0 0
  %691 = vmatprep.subr.bf16.mxu0 0
  %692 = vmatpush1.bf16.xpose.msra.mxu0 0
  %693 = vmatprep.mubr.bf16.mxu0 0
  %694 = vmatmul.mubr.bf16.gmra.mrb[0].mxu0 %v656
  %v695 = vpop.f32.mrb[0].mxu0
  %v696 = vadd.f32 0.0, %v695
  %v697 = vpop.f32.mrb[0].mxu0
  %v698 = vpop.f32.mrb[0].mxu0
  %v699 = vadd.f32 0.0, %v698
  %v700 = vpop.f32.mrb[0].mxu0
  %701 = vdwg.mxu0
  %v702 = vsel %vm283, %v696, -inf
  %703 = vmax.xlane.f32.xlu0 %v702
  %v704 = vpop.xlane.xlu0 %703
  %v705 = vsel %vm283, %v699, -inf
  %706 = vmax.xlane.f32.xlu0 %v705
  %v707 = vpop.xlane.xlu0 %706
  %v708 = vsub.f32 %v696, %v704
  %v709 = vsub.f32 %v699, %v707
  %v710 = vmul.f32 %v708, 1.442695
  %v711 = vpow.pop %v710
  %v712 = vmul.f32 %v709, 1.442695
  %v713 = vpow.pop %v712
  %v714 = vsel %vm283, %v711, 0.0
  %715 = vadd.xlane.f32.xlu0 %v714
  %v716 = vpop.xlane.xlu0 %715
  %v717 = vsel %vm283, %v713, 0.0
  %718 = vadd.xlane.f32.xlu0 %v717
  %v719 = vpop.xlane.xlu0 %718
  %v720 = vrcp.pop %v716
  %v721 = vrcp.pop %v719
  %v722 = vmul.f32 %v711, %v720
  %v723 = vmul.f32 %v713, %v721
  %v724 = vpack.c.bf16 %v723, %v722
  %725 = vrot.lane.b32.xlu0 %v279, 40
  %v726 = vpop.permute.xlu0 %725
  %v728 = vsel %vm283, %v724, 0
  %v731 = vsel %vm359, %v726, 0
  %733 = vmatprep.subr.bf16.mxu0 0
  %734 = vmatpush1.bf16.msra.mxu0 %v731
  %735 = vmatprep.subr.bf16.mxu0 0
  %736 = vmatpush1.bf16.msra.mxu0 0
  %737 = vmatprep.subr.bf16.mxu0 0
  %738 = vmatpush1.bf16.msra.mxu0 0
  %739 = vmatprep.subr.bf16.mxu0 0
  %740 = vmatpush1.bf16.msra.mxu0 0
  %741 = vmatprep.subr.bf16.mxu0 0
  %742 = vmatpush1.bf16.msra.mxu0 0
  %743 = vmatprep.subr.bf16.mxu0 0
  %744 = vmatpush1.bf16.msra.mxu0 0
  %745 = vmatprep.subr.bf16.mxu0 0
  %746 = vmatpush1.bf16.msra.mxu0 0
  %747 = vmatprep.subr.bf16.mxu0 0
  %748 = vmatpush1.bf16.msra.mxu0 0
  %749 = vmatprep.subr.bf16.mxu0 0
  %750 = vmatpush1.bf16.msra.mxu0 0
  %751 = vmatprep.subr.bf16.mxu0 0
  %752 = vmatpush1.bf16.msra.mxu0 0
  %753 = vmatprep.subr.bf16.mxu0 0
  %754 = vmatpush1.bf16.msra.mxu0 0
  %755 = vmatprep.subr.bf16.mxu0 0
  %756 = vmatpush1.bf16.msra.mxu0 0
  %757 = vmatprep.subr.bf16.mxu0 0
  %758 = vmatpush1.bf16.msra.mxu0 0
  %759 = vmatprep.subr.bf16.mxu0 0
  %760 = vmatpush1.bf16.msra.mxu0 0
  %761 = vmatprep.subr.bf16.mxu0 0
  %762 = vmatpush1.bf16.msra.mxu0 0
  %763 = vmatprep.subr.bf16.mxu0 0
  %764 = vmatpush1.bf16.msra.mxu0 0
  %765 = vmatprep.mubr.bf16.mxu0 0
  %766 = vmatmul.mubr.bf16.gmra.mrb[0].mxu0 %v728
  %v767 = vpop.f32.mrb[0].mxu0
  %v768 = vadd.f32 0.0, %v767
  %v769 = vpop.f32.mrb[0].mxu0
  %v770 = vpop.f32.mrb[0].mxu0
  %v771 = vadd.f32 0.0, %v770
  %v772 = vpop.f32.mrb[0].mxu0
  %773 = vdwg.mxu0
  %776 = vrot.lane.b32.xlu0 %v522, 8
  %v777 = vpop.permute.xlu0 %776
  %778 = vrot.lane.b32.xlu0 %v525, 8
  %v779 = vpop.permute.xlu0 %778
  %784 = vrot.lane.b32.xlu0 %v645, 16
  %v785 = vpop.permute.xlu0 %784
  %786 = vrot.lane.b32.xlu0 %v648, 16
  %v787 = vpop.permute.xlu0 %786
  %792 = vrot.lane.b32.xlu0 %v768, 24
  %v793 = vpop.permute.xlu0 %792
  %794 = vrot.lane.b32.xlu0 %v771, 24
  %v795 = vpop.permute.xlu0 %794
  %v798 = vsel %vm283, %v398, %v777
  %v799 = vsel %vm283, %v401, %v779
  %vm800 = vcmask 130048
  %v801 = vsel %vm800, %v798, %v785
  %v802 = vsel %vm800, %v799, %v787
  %vm803 = vcmask 195584
  %v804 = vsel %vm803, %v801, %v793
  %v805 = vsel %vm803, %v802, %v795
  %v806 = vpack.c.bf16 %v267, %v264
  %v807 = vpack.c.bf16 %v275, %v275
  %809 = vrot.lane.b32.xlu0 %v807, 96
  %v810 = vpop.permute.xlu0 %809
  %v812 = vsel %vm283, %v806, 0
  %v815 = vsel %vm283, %v810, 0
  %817 = vmatprep.subr.bf16.mxu0 0
  %818 = vmatpush1.bf16.xpose.msra.mxu0 %v815
  %819 = vmatprep.subr.bf16.mxu0 0
  %820 = vmatpush1.bf16.xpose.msra.mxu0 0
  %821 = vmatprep.subr.bf16.mxu0 0
  %822 = vmatpush1.bf16.xpose.msra.mxu0 0
  %823 = vmatprep.subr.bf16.mxu0 0
  %824 = vmatpush1.bf16.xpose.msra.mxu0 0
  %825 = vmatprep.subr.bf16.mxu0 0
  %826 = vmatpush1.bf16.xpose.msra.mxu0 0
  %827 = vmatprep.subr.bf16.mxu0 0
  %828 = vmatpush1.bf16.xpose.msra.mxu0 0
  %829 = vmatprep.subr.bf16.mxu0 0
  %830 = vmatpush1.bf16.xpose.msra.mxu0 0
  %831 = vmatprep.subr.bf16.mxu0 0
  %832 = vmatpush1.bf16.xpose.msra.mxu0 0
  %833 = vmatprep.subr.bf16.mxu0 0
  %834 = vmatpush1.bf16.xpose.msra.mxu0 0
  %835 = vmatprep.subr.bf16.mxu0 0
  %836 = vmatpush1.bf16.xpose.msra.mxu0 0
  %837 = vmatprep.subr.bf16.mxu0 0
  %838 = vmatpush1.bf16.xpose.msra.mxu0 0
  %839 = vmatprep.subr.bf16.mxu0 0
  %840 = vmatpush1.bf16.xpose.msra.mxu0 0
  %841 = vmatprep.subr.bf16.mxu0 0
  %842 = vmatpush1.bf16.xpose.msra.mxu0 0
  %843 = vmatprep.subr.bf16.mxu0 0
  %844 = vmatpush1.bf16.xpose.msra.mxu0 0
  %845 = vmatprep.subr.bf16.mxu0 0
  %846 = vmatpush1.bf16.xpose.msra.mxu0 0
  %847 = vmatprep.subr.bf16.mxu0 0
  %848 = vmatpush1.bf16.xpose.msra.mxu0 0
  %849 = vmatprep.mubr.bf16.mxu0 0
  %850 = vmatmul.mubr.bf16.gmra.mrb[0].mxu0 %v812
  %v851 = vpop.f32.mrb[0].mxu0
  %v852 = vadd.f32 0.0, %v851
  %v853 = vpop.f32.mrb[0].mxu0
  %v854 = vpop.f32.mrb[0].mxu0
  %v855 = vadd.f32 0.0, %v854
  %v856 = vpop.f32.mrb[0].mxu0
  %857 = vdwg.mxu0
  %v858 = vsel %vm283, %v852, -inf
  %859 = vmax.xlane.f32.xlu0 %v858
  %v860 = vpop.xlane.xlu0 %859
  %v861 = vsel %vm283, %v855, -inf
  %862 = vmax.xlane.f32.xlu0 %v861
  %v863 = vpop.xlane.xlu0 %862
  %v864 = vsub.f32 %v852, %v860
  %v865 = vsub.f32 %v855, %v863
  %v866 = vmul.f32 %v864, 1.442695
  %v867 = vpow.pop %v866
  %v868 = vmul.f32 %v865, 1.442695
  %v869 = vpow.pop %v868
  %v870 = vsel %vm283, %v867, 0.0
  %871 = vadd.xlane.f32.xlu0 %v870
  %v872 = vpop.xlane.xlu0 %871
  %v873 = vsel %vm283, %v869, 0.0
  %874 = vadd.xlane.f32.xlu0 %v873
  %v875 = vpop.xlane.xlu0 %874
  %v876 = vrcp.pop %v872
  %v877 = vrcp.pop %v875
  %v878 = vmul.f32 %v867, %v876
  %v879 = vmul.f32 %v869, %v877
  %v880 = vpack.c.bf16 %v879, %v878
  %881 = vrot.lane.b32.xlu0 %v807, 64
  %v882 = vpop.permute.xlu0 %881
  %v884 = vsel %vm283, %v880, 0
  %v887 = vsel %vm359, %v882, 0
  %889 = vmatprep.subr.bf16.mxu0 0
  %890 = vmatpush1.bf16.msra.mxu0 %v887
  %891 = vmatprep.subr.bf16.mxu0 0
  %892 = vmatpush1.bf16.msra.mxu0 0
  %893 = vmatprep.subr.bf16.mxu0 0
  %894 = vmatpush1.bf16.msra.mxu0 0
  %895 = vmatprep.subr.bf16.mxu0 0
  %896 = vmatpush1.bf16.msra.mxu0 0
  %897 = vmatprep.subr.bf16.mxu0 0
  %898 = vmatpush1.bf16.msra.mxu0 0
  %899 = vmatprep.subr.bf16.mxu0 0
  %900 = vmatpush1.bf16.msra.mxu0 0
  %901 = vmatprep.subr.bf16.mxu0 0
  %902 = vmatpush1.bf16.msra.mxu0 0
  %903 = vmatprep.subr.bf16.mxu0 0
  %904 = vmatpush1.bf16.msra.mxu0 0
  %905 = vmatprep.subr.bf16.mxu0 0
  %906 = vmatpush1.bf16.msra.mxu0 0
  %907 = vmatprep.subr.bf16.mxu0 0
  %908 = vmatpush1.bf16.msra.mxu0 0
  %909 = vmatprep.subr.bf16.mxu0 0
  %910 = vmatpush1.bf16.msra.mxu0 0
  %911 = vmatprep.subr.bf16.mxu0 0
  %912 = vmatpush1.bf16.msra.mxu0 0
  %913 = vmatprep.subr.bf16.mxu0 0
  %914 = vmatpush1.bf16.msra.mxu0 0
  %915 = vmatprep.subr.bf16.mxu0 0
  %916 = vmatpush1.bf16.msra.mxu0 0
  %917 = vmatprep.subr.bf16.mxu0 0
  %918 = vmatpush1.bf16.msra.mxu0 0
  %919 = vmatprep.subr.bf16.mxu0 0
  %920 = vmatpush1.bf16.msra.mxu0 0
  %921 = vmatprep.mubr.bf16.mxu0 0
  %922 = vmatmul.mubr.bf16.gmra.mrb[0].mxu0 %v884
  %v923 = vpop.f32.mrb[0].mxu0
  %v924 = vadd.f32 0.0, %v923
  %v925 = vpop.f32.mrb[0].mxu0
  %v926 = vpop.f32.mrb[0].mxu0
  %v927 = vadd.f32 0.0, %v926
  %v928 = vpop.f32.mrb[0].mxu0
  %929 = vdwg.mxu0
  %931 = vrot.lane.b32.xlu0 %v806, 120
  %v932 = vpop.permute.xlu0 %931
  %933 = vrot.lane.b32.xlu0 %v807, 88
  %v934 = vpop.permute.xlu0 %933
  %v936 = vsel %vm283, %v932, 0
  %v939 = vsel %vm283, %v934, 0
  %941 = vmatprep.subr.bf16.mxu0 0
  %942 = vmatpush1.bf16.xpose.msra.mxu0 %v939
  %943 = vmatprep.subr.bf16.mxu0 0
  %944 = vmatpush1.bf16.xpose.msra.mxu0 0
  %945 = vmatprep.subr.bf16.mxu0 0
  %946 = vmatpush1.bf16.xpose.msra.mxu0 0
  %947 = vmatprep.subr.bf16.mxu0 0
  %948 = vmatpush1.bf16.xpose.msra.mxu0 0
  %949 = vmatprep.subr.bf16.mxu0 0
  %950 = vmatpush1.bf16.xpose.msra.mxu0 0
  %951 = vmatprep.subr.bf16.mxu0 0
  %952 = vmatpush1.bf16.xpose.msra.mxu0 0
  %953 = vmatprep.subr.bf16.mxu0 0
  %954 = vmatpush1.bf16.xpose.msra.mxu0 0
  %955 = vmatprep.subr.bf16.mxu0 0
  %956 = vmatpush1.bf16.xpose.msra.mxu0 0
  %957 = vmatprep.subr.bf16.mxu0 0
  %958 = vmatpush1.bf16.xpose.msra.mxu0 0
  %959 = vmatprep.subr.bf16.mxu0 0
  %960 = vmatpush1.bf16.xpose.msra.mxu0 0
  %961 = vmatprep.subr.bf16.mxu0 0
  %962 = vmatpush1.bf16.xpose.msra.mxu0 0
  %963 = vmatprep.subr.bf16.mxu0 0
  %964 = vmatpush1.bf16.xpose.msra.mxu0 0
  %965 = vmatprep.subr.bf16.mxu0 0
  %966 = vmatpush1.bf16.xpose.msra.mxu0 0
  %967 = vmatprep.subr.bf16.mxu0 0
  %968 = vmatpush1.bf16.xpose.msra.mxu0 0
  %969 = vmatprep.subr.bf16.mxu0 0
  %970 = vmatpush1.bf16.xpose.msra.mxu0 0
  %971 = vmatprep.subr.bf16.mxu0 0
  %972 = vmatpush1.bf16.xpose.msra.mxu0 0
  %973 = vmatprep.mubr.bf16.mxu0 0
  %974 = vmatmul.mubr.bf16.gmra.mrb[0].mxu0 %v936
  %v975 = vpop.f32.mrb[0].mxu0
  %v976 = vadd.f32 0.0, %v975
  %v977 = vpop.f32.mrb[0].mxu0
  %v978 = vpop.f32.mrb[0].mxu0
  %v979 = vadd.f32 0.0, %v978
  %v980 = vpop.f32.mrb[0].mxu0
  %981 = vdwg.mxu0
  %v982 = vsel %vm283, %v976, -inf
  %983 = vmax.xlane.f32.xlu0 %v982
  %v984 = vpop.xlane.xlu0 %983
  %v985 = vsel %vm283, %v979, -inf
  %986 = vmax.xlane.f32.xlu0 %v985
  %v987 = vpop.xlane.xlu0 %986
  %v988 = vsub.f32 %v976, %v984
  %v989 = vsub.f32 %v979, %v987
  %v990 = vmul.f32 %v988, 1.442695
  %v991 = vpow.pop %v990
  %v992 = vmul.f32 %v989, 1.442695
  %v993 = vpow.pop %v992
  %v994 = vsel %vm283, %v991, 0.0
  %995 = vadd.xlane.f32.xlu0 %v994
  %v996 = vpop.xlane.xlu0 %995
  %v997 = vsel %vm283, %v993, 0.0
  %998 = vadd.xlane.f32.xlu0 %v997
  %v999 = vpop.xlane.xlu0 %998
  %v1000 = vrcp.pop %v996
  %v1001 = vrcp.pop %v999
  %v1002 = vmul.f32 %v991, %v1000
  %v1003 = vmul.f32 %v993, %v1001
  %v1004 = vpack.c.bf16 %v1003, %v1002
  %1005 = vrot.lane.b32.xlu0 %v807, 56
  %v1006 = vpop.permute.xlu0 %1005
  %v1008 = vsel %vm283, %v1004, 0
  %v1011 = vsel %vm359, %v1006, 0
  %1013 = vmatprep.subr.bf16.mxu0 0
  %1014 = vmatpush1.bf16.msra.mxu0 %v1011
  %1015 = vmatprep.subr.bf16.mxu0 0
  %1016 = vmatpush1.bf16.msra.mxu0 0
  %1017 = vmatprep.subr.bf16.mxu0 0
  %1018 = vmatpush1.bf16.msra.mxu0 0
  %1019 = vmatprep.subr.bf16.mxu0 0
  %1020 = vmatpush1.bf16.msra.mxu0 0
  %1021 = vmatprep.subr.bf16.mxu0 0
  %1022 = vmatpush1.bf16.msra.mxu0 0
  %1023 = vmatprep.subr.bf16.mxu0 0
  %1024 = vmatpush1.bf16.msra.mxu0 0
  %1025 = vmatprep.subr.bf16.mxu0 0
  %1026 = vmatpush1.bf16.msra.mxu0 0
  %1027 = vmatprep.subr.bf16.mxu0 0
  %1028 = vmatpush1.bf16.msra.mxu0 0
  %1029 = vmatprep.subr.bf16.mxu0 0
  %1030 = vmatpush1.bf16.msra.mxu0 0
  %1031 = vmatprep.subr.bf16.mxu0 0
  %1032 = vmatpush1.bf16.msra.mxu0 0
  %1033 = vmatprep.subr.bf16.mxu0 0
  %1034 = vmatpush1.bf16.msra.mxu0 0
  %1035 = vmatprep.subr.bf16.mxu0 0
  %1036 = vmatpush1.bf16.msra.mxu0 0
  %1037 = vmatprep.subr.bf16.mxu0 0
  %1038 = vmatpush1.bf16.msra.mxu0 0
  %1039 = vmatprep.subr.bf16.mxu0 0
  %1040 = vmatpush1.bf16.msra.mxu0 0
  %1041 = vmatprep.subr.bf16.mxu0 0
  %1042 = vmatpush1.bf16.msra.mxu0 0
  %1043 = vmatprep.subr.bf16.mxu0 0
  %1044 = vmatpush1.bf16.msra.mxu0 0
  %1045 = vmatprep.mubr.bf16.mxu0 0
  %1046 = vmatmul.mubr.bf16.gmra.mrb[0].mxu0 %v1008
  %v1047 = vpop.f32.mrb[0].mxu0
  %v1048 = vadd.f32 0.0, %v1047
  %v1049 = vpop.f32.mrb[0].mxu0
  %v1050 = vpop.f32.mrb[0].mxu0
  %v1051 = vadd.f32 0.0, %v1050
  %v1052 = vpop.f32.mrb[0].mxu0
  %1053 = vdwg.mxu0
  %1054 = vrot.lane.b32.xlu0 %v806, 112
  %v1055 = vpop.permute.xlu0 %1054
  %1056 = vrot.lane.b32.xlu0 %v807, 80
  %v1057 = vpop.permute.xlu0 %1056
  %v1059 = vsel %vm283, %v1055, 0
  %v1062 = vsel %vm283, %v1057, 0
  %1064 = vmatprep.subr.bf16.mxu0 0
  %1065 = vmatpush1.bf16.xpose.msra.mxu0 %v1062
  %1066 = vmatprep.subr.bf16.mxu0 0
  %1067 = vmatpush1.bf16.xpose.msra.mxu0 0
  %1068 = vmatprep.subr.bf16.mxu0 0
  %1069 = vmatpush1.bf16.xpose.msra.mxu0 0
  %1070 = vmatprep.subr.bf16.mxu0 0
  %1071 = vmatpush1.bf16.xpose.msra.mxu0 0
  %1072 = vmatprep.subr.bf16.mxu0 0
  %1073 = vmatpush1.bf16.xpose.msra.mxu0 0
  %1074 = vmatprep.subr.bf16.mxu0 0
  %1075 = vmatpush1.bf16.xpose.msra.mxu0 0
  %1076 = vmatprep.subr.bf16.mxu0 0
  %1077 = vmatpush1.bf16.xpose.msra.mxu0 0
  %1078 = vmatprep.subr.bf16.mxu0 0
  %1079 = vmatpush1.bf16.xpose.msra.mxu0 0
  %1080 = vmatprep.subr.bf16.mxu0 0
  %1081 = vmatpush1.bf16.xpose.msra.mxu0 0
  %1082 = vmatprep.subr.bf16.mxu0 0
  %1083 = vmatpush1.bf16.xpose.msra.mxu0 0
  %1084 = vmatprep.subr.bf16.mxu0 0
  %1085 = vmatpush1.bf16.xpose.msra.mxu0 0
  %1086 = vmatprep.subr.bf16.mxu0 0
  %1087 = vmatpush1.bf16.xpose.msra.mxu0 0
  %1088 = vmatprep.subr.bf16.mxu0 0
  %1089 = vmatpush1.bf16.xpose.msra.mxu0 0
  %1090 = vmatprep.subr.bf16.mxu0 0
  %1091 = vmatpush1.bf16.xpose.msra.mxu0 0
  %1092 = vmatprep.subr.bf16.mxu0 0
  %1093 = vmatpush1.bf16.xpose.msra.mxu0 0
  %1094 = vmatprep.subr.bf16.mxu0 0
  %1095 = vmatpush1.bf16.xpose.msra.mxu0 0
  %1096 = vmatprep.mubr.bf16.mxu0 0
  %1097 = vmatmul.mubr.bf16.gmra.mrb[0].mxu0 %v1059
  %v1098 = vpop.f32.mrb[0].mxu0
  %v1099 = vadd.f32 0.0, %v1098
  %v1100 = vpop.f32.mrb[0].mxu0
  %v1101 = vpop.f32.mrb[0].mxu0
  %v1102 = vadd.f32 0.0, %v1101
  %v1103 = vpop.f32.mrb[0].mxu0
  %1104 = vdwg.mxu0
  %v1105 = vsel %vm283, %v1099, -inf
  %1106 = vmax.xlane.f32.xlu0 %v1105
  %v1107 = vpop.xlane.xlu0 %1106
  %v1108 = vsel %vm283, %v1102, -inf
  %1109 = vmax.xlane.f32.xlu0 %v1108
  %v1110 = vpop.xlane.xlu0 %1109
  %v1111 = vsub.f32 %v1099, %v1107
  %v1112 = vsub.f32 %v1102, %v1110
  %v1113 = vmul.f32 %v1111, 1.442695
  %v1114 = vpow.pop %v1113
  %v1115 = vmul.f32 %v1112, 1.442695
  %v1116 = vpow.pop %v1115
  %v1117 = vsel %vm283, %v1114, 0.0
  %1118 = vadd.xlane.f32.xlu0 %v1117
  %v1119 = vpop.xlane.xlu0 %1118
  %v1120 = vsel %vm283, %v1116, 0.0
  %1121 = vadd.xlane.f32.xlu0 %v1120
  %v1122 = vpop.xlane.xlu0 %1121
  %v1123 = vrcp.pop %v1119
  %v1124 = vrcp.pop %v1122
  %v1125 = vmul.f32 %v1114, %v1123
  %v1126 = vmul.f32 %v1116, %v1124
  %v1127 = vpack.c.bf16 %v1126, %v1125
  %1128 = vrot.lane.b32.xlu0 %v807, 48
  %v1129 = vpop.permute.xlu0 %1128
  %v1131 = vsel %vm283, %v1127, 0
  %v1134 = vsel %vm359, %v1129, 0
  %1136 = vmatprep.subr.bf16.mxu0 0
  %1137 = vmatpush1.bf16.msra.mxu0 %v1134
  %1138 = vmatprep.subr.bf16.mxu0 0
  %1139 = vmatpush1.bf16.msra.mxu0 0
  %1140 = vmatprep.subr.bf16.mxu0 0
  %1141 = vmatpush1.bf16.msra.mxu0 0
  %1142 = vmatprep.subr.bf16.mxu0 0
  %1143 = vmatpush1.bf16.msra.mxu0 0
  %1144 = vmatprep.subr.bf16.mxu0 0
  %1145 = vmatpush1.bf16.msra.mxu0 0
  %1146 = vmatprep.subr.bf16.mxu0 0
  %1147 = vmatpush1.bf16.msra.mxu0 0
  %1148 = vmatprep.subr.bf16.mxu0 0
  %1149 = vmatpush1.bf16.msra.mxu0 0
  %1150 = vmatprep.subr.bf16.mxu0 0
  %1151 = vmatpush1.bf16.msra.mxu0 0
  %1152 = vmatprep.subr.bf16.mxu0 0
  %1153 = vmatpush1.bf16.msra.mxu0 0
  %1154 = vmatprep.subr.bf16.mxu0 0
  %1155 = vmatpush1.bf16.msra.mxu0 0
  %1156 = vmatprep.subr.bf16.mxu0 0
  %1157 = vmatpush1.bf16.msra.mxu0 0
  %1158 = vmatprep.subr.bf16.mxu0 0
  %1159 = vmatpush1.bf16.msra.mxu0 0
  %1160 = vmatprep.subr.bf16.mxu0 0
  %1161 = vmatpush1.bf16.msra.mxu0 0
  %1162 = vmatprep.subr.bf16.mxu0 0
  %1163 = vmatpush1.bf16.msra.mxu0 0
  %1164 = vmatprep.subr.bf16.mxu0 0
  %1165 = vmatpush1.bf16.msra.mxu0 0
  %1166 = vmatprep.subr.bf16.mxu0 0
  %1167 = vmatpush1.bf16.msra.mxu0 0
  %1168 = vmatprep.mubr.bf16.mxu0 0
  %1169 = vmatmul.mubr.bf16.gmra.mrb[0].mxu0 %v1131
  %v1170 = vpop.f32.mrb[0].mxu0
  %v1171 = vadd.f32 0.0, %v1170
  %v1172 = vpop.f32.mrb[0].mxu0
  %v1173 = vpop.f32.mrb[0].mxu0
  %v1174 = vadd.f32 0.0, %v1173
  %v1175 = vpop.f32.mrb[0].mxu0
  %1176 = vdwg.mxu0
  %1177 = vrot.lane.b32.xlu0 %v806, 104
  %v1178 = vpop.permute.xlu0 %1177
  %1179 = vrot.lane.b32.xlu0 %v807, 72
  %v1180 = vpop.permute.xlu0 %1179
  %v1182 = vsel %vm283, %v1178, 0
  %v1185 = vsel %vm283, %v1180, 0
  %1187 = vmatprep.subr.bf16.mxu0 0
  %1188 = vmatpush1.bf16.xpose.msra.mxu0 %v1185
  %1189 = vmatprep.subr.bf16.mxu0 0
  %1190 = vmatpush1.bf16.xpose.msra.mxu0 0
  %1191 = vmatprep.subr.bf16.mxu0 0
  %1192 = vmatpush1.bf16.xpose.msra.mxu0 0
  %1193 = vmatprep.subr.bf16.mxu0 0
  %1194 = vmatpush1.bf16.xpose.msra.mxu0 0
  %1195 = vmatprep.subr.bf16.mxu0 0
  %1196 = vmatpush1.bf16.xpose.msra.mxu0 0
  %1197 = vmatprep.subr.bf16.mxu0 0
  %1198 = vmatpush1.bf16.xpose.msra.mxu0 0
  %1199 = vmatprep.subr.bf16.mxu0 0
  %1200 = vmatpush1.bf16.xpose.msra.mxu0 0
  %1201 = vmatprep.subr.bf16.mxu0 0
  %1202 = vmatpush1.bf16.xpose.msra.mxu0 0
  %1203 = vmatprep.subr.bf16.mxu0 0
  %1204 = vmatpush1.bf16.xpose.msra.mxu0 0
  %1205 = vmatprep.subr.bf16.mxu0 0
  %1206 = vmatpush1.bf16.xpose.msra.mxu0 0
  %1207 = vmatprep.subr.bf16.mxu0 0
  %1208 = vmatpush1.bf16.xpose.msra.mxu0 0
  %1209 = vmatprep.subr.bf16.mxu0 0
  %1210 = vmatpush1.bf16.xpose.msra.mxu0 0
  %1211 = vmatprep.subr.bf16.mxu0 0
  %1212 = vmatpush1.bf16.xpose.msra.mxu0 0
  %1213 = vmatprep.subr.bf16.mxu0 0
  %1214 = vmatpush1.bf16.xpose.msra.mxu0 0
  %1215 = vmatprep.subr.bf16.mxu0 0
  %1216 = vmatpush1.bf16.xpose.msra.mxu0 0
  %1217 = vmatprep.subr.bf16.mxu0 0
  %1218 = vmatpush1.bf16.xpose.msra.mxu0 0
  %1219 = vmatprep.mubr.bf16.mxu0 0
  %1220 = vmatmul.mubr.bf16.gmra.mrb[0].mxu0 %v1182
  %v1221 = vpop.f32.mrb[0].mxu0
  %v1222 = vadd.f32 0.0, %v1221
  %v1223 = vpop.f32.mrb[0].mxu0
  %v1224 = vpop.f32.mrb[0].mxu0
  %v1225 = vadd.f32 0.0, %v1224
  %v1226 = vpop.f32.mrb[0].mxu0
  %1227 = vdwg.mxu0
  %v1228 = vsel %vm283, %v1222, -inf
  %1229 = vmax.xlane.f32.xlu0 %v1228
  %v1230 = vpop.xlane.xlu0 %1229
  %v1231 = vsel %vm283, %v1225, -inf
  %1232 = vmax.xlane.f32.xlu0 %v1231
  %v1233 = vpop.xlane.xlu0 %1232
  %v1234 = vsub.f32 %v1222, %v1230
  %v1235 = vsub.f32 %v1225, %v1233
  %v1236 = vmul.f32 %v1234, 1.442695
  %v1237 = vpow.pop %v1236
  %v1238 = vmul.f32 %v1235, 1.442695
  %v1239 = vpow.pop %v1238
  %v1240 = vsel %vm283, %v1237, 0.0
  %1241 = vadd.xlane.f32.xlu0 %v1240
  %v1242 = vpop.xlane.xlu0 %1241
  %v1243 = vsel %vm283, %v1239, 0.0
  %1244 = vadd.xlane.f32.xlu0 %v1243
  %v1245 = vpop.xlane.xlu0 %1244
  %v1246 = vrcp.pop %v1242
  %v1247 = vrcp.pop %v1245
  %v1248 = vmul.f32 %v1237, %v1246
  %v1249 = vmul.f32 %v1239, %v1247
  %v1250 = vpack.c.bf16 %v1249, %v1248
  %1251 = vrot.lane.b32.xlu0 %v807, 40
  %v1252 = vpop.permute.xlu0 %1251
  %v1254 = vsel %vm283, %v1250, 0
  %v1257 = vsel %vm359, %v1252, 0
  %1259 = vmatprep.subr.bf16.mxu0 0
  %1260 = vmatpush1.bf16.msra.mxu0 %v1257
  %1261 = vmatprep.subr.bf16.mxu0 0
  %1262 = vmatpush1.bf16.msra.mxu0 0
  %1263 = vmatprep.subr.bf16.mxu0 0
  %1264 = vmatpush1.bf16.msra.mxu0 0
  %1265 = vmatprep.subr.bf16.mxu0 0
  %1266 = vmatpush1.bf16.msra.mxu0 0
  %1267 = vmatprep.subr.bf16.mxu0 0
  %1268 = vmatpush1.bf16.msra.mxu0 0
  %1269 = vmatprep.subr.bf16.mxu0 0
  %1270 = vmatpush1.bf16.msra.mxu0 0
  %1271 = vmatprep.subr.bf16.mxu0 0
  %1272 = vmatpush1.bf16.msra.mxu0 0
  %1273 = vmatprep.subr.bf16.mxu0 0
  %1274 = vmatpush1.bf16.msra.mxu0 0
  %1275 = vmatprep.subr.bf16.mxu0 0
  %1276 = vmatpush1.bf16.msra.mxu0 0
  %1277 = vmatprep.subr.bf16.mxu0 0
  %1278 = vmatpush1.bf16.msra.mxu0 0
  %1279 = vmatprep.subr.bf16.mxu0 0
  %1280 = vmatpush1.bf16.msra.mxu0 0
  %1281 = vmatprep.subr.bf16.mxu0 0
  %1282 = vmatpush1.bf16.msra.mxu0 0
  %1283 = vmatprep.subr.bf16.mxu0 0
  %1284 = vmatpush1.bf16.msra.mxu0 0
  %1285 = vmatprep.subr.bf16.mxu0 0
  %1286 = vmatpush1.bf16.msra.mxu0 0
  %1287 = vmatprep.subr.bf16.mxu0 0
  %1288 = vmatpush1.bf16.msra.mxu0 0
  %1289 = vmatprep.subr.bf16.mxu0 0
  %1290 = vmatpush1.bf16.msra.mxu0 0
  %1291 = vmatprep.mubr.bf16.mxu0 0
  %1292 = vmatmul.mubr.bf16.gmra.mrb[0].mxu0 %v1254
  %v1293 = vpop.f32.mrb[0].mxu0
  %v1294 = vadd.f32 0.0, %v1293
  %v1295 = vpop.f32.mrb[0].mxu0
  %v1296 = vpop.f32.mrb[0].mxu0
  %v1297 = vadd.f32 0.0, %v1296
  %v1298 = vpop.f32.mrb[0].mxu0
  %1299 = vdwg.mxu0
  %1302 = vrot.lane.b32.xlu0 %v1048, 8
  %v1303 = vpop.permute.xlu0 %1302
  %1304 = vrot.lane.b32.xlu0 %v1051, 8
  %v1305 = vpop.permute.xlu0 %1304
  %1310 = vrot.lane.b32.xlu0 %v1171, 16
  %v1311 = vpop.permute.xlu0 %1310
  %1312 = vrot.lane.b32.xlu0 %v1174, 16
  %v1313 = vpop.permute.xlu0 %1312
  %1318 = vrot.lane.b32.xlu0 %v1294, 24
  %v1319 = vpop.permute.xlu0 %1318
  %1320 = vrot.lane.b32.xlu0 %v1297, 24
  %v1321 = vpop.permute.xlu0 %1320
  %v1324 = vsel %vm283, %v924, %v1303
  %v1325 = vsel %vm283, %v927, %v1305
  %v1326 = vsel %vm800, %v1324, %v1311
  %v1327 = vsel %vm800, %v1325, %v1313
  %v1328 = vsel %vm803, %v1326, %v1319
  %v1329 = vsel %vm803, %v1327, %v1321
  %v1330 = vpack.c.bf16 %v805, %v804
  %v1331 = vpack.c.bf16 %v1329, %v1328
  %v1332 = vld [vmem:[%s4] sm:$0xf]
  %v1333 = vld [vmem:[%s4 + $0x4] sm:$0xf]
  %v1334 = vld [vmem:[%s4 + $0x8] sm:$0xf]
  %v1335 = vld [vmem:[%s4 + $0xc] sm:$0xf]
  %v1336 = vld [vmem:[%s5] sm:$0x1]
  %v1338 = vlaneseq
  %v1339 = vshrl.u32 %v1338, 7
  %v1340 = vsub.s32 0, %v1339
  %v1341 = vrot.slane %v1336, %v1340
  %v1347 = vunpack.c.l.b16 %v1332
  %v1348 = vunpack.c.l.b16 %v1333
  %v1349 = vunpack.c.l.b16 %v1334
  %v1350 = vunpack.c.l.b16 %v1335
  %v1351 = vpack.c.b16 %v1348, %v1347
  %v1352 = vpack.c.b16 %v1350, %v1349
  %v1356 = vsel %vm211, %v1330, 0
  %v1359 = vsel %vm211, %v1331, 0
  %1361 = vmatprep.subr.bf16.mxu0 0
  %1362 = vmatpush1.bf16.msra.mxu0 %v1351
  %1363 = vmatprep.subr.bf16.mxu0 0
  %1364 = vmatpush1.bf16.msra.mxu0 %v1352
  %1365 = vmatprep.subr.bf16.mxu0 0
  %1366 = vmatpush1.bf16.msra.mxu0 0
  %1367 = vmatprep.subr.bf16.mxu0 0
  %1368 = vmatpush1.bf16.msra.mxu0 0
  %1369 = vmatprep.subr.bf16.mxu0 0
  %1370 = vmatpush1.bf16.msra.mxu0 0
  %1371 = vmatprep.subr.bf16.mxu0 0
  %1372 = vmatpush1.bf16.msra.mxu0 0
  %1373 = vmatprep.subr.bf16.mxu0 0
  %1374 = vmatpush1.bf16.msra.mxu0 0
  %1375 = vmatprep.subr.bf16.mxu0 0
  %1376 = vmatpush1.bf16.msra.mxu0 0
  %1377 = vmatprep.subr.bf16.mxu0 0
  %1378 = vmatpush1.bf16.msra.mxu0 0
  %1379 = vmatprep.subr.bf16.mxu0 0
  %1380 = vmatpush1.bf16.msra.mxu0 0
  %1381 = vmatprep.subr.bf16.mxu0 0
  %1382 = vmatpush1.bf16.msra.mxu0 0
  %1383 = vmatprep.subr.bf16.mxu0 0
  %1384 = vmatpush1.bf16.msra.mxu0 0
  %1385 = vmatprep.subr.bf16.mxu0 0
  %1386 = vmatpush1.bf16.msra.mxu0 0
  %1387 = vmatprep.subr.bf16.mxu0 0
  %1388 = vmatpush1.bf16.msra.mxu0 0
  %1389 = vmatprep.subr.bf16.mxu0 0
  %1390 = vmatpush1.bf16.msra.mxu0 0
  %1391 = vmatprep.subr.bf16.mxu0 0
  %1392 = vmatpush1.bf16.msra.mxu0 0
  %1393 = vmatprep.mubr.bf16.mxu0 0
  %1394 = vmatmul.mubr.bf16.gmra.mrb[0].mxu0 %v1356
  %v1395 = vpop.f32.mrb[0].mxu0
  %v1396 = vadd.f32 %v1341, %v1395
  %v1397 = vpop.f32.mrb[0].mxu0
  %v1398 = vpop.f32.mrb[0].mxu0
  %v1399 = vadd.f32 %v1341, %v1398
  %v1400 = vpop.f32.mrb[0].mxu0
  %1401 = vmatprep.mubr.bf16.mxu0 0
  %1402 = vmatmul.mubr.bf16.gmra.mrb[0].mxu0 %v1359
  %v1403 = vpop.f32.mrb[0].mxu0
  %v1404 = vadd.f32 %v1341, %v1403
  %v1405 = vpop.f32.mrb[0].mxu0
  %v1406 = vpop.f32.mrb[0].mxu0
  %v1407 = vadd.f32 %v1341, %v1406
  %v1408 = vpop.f32.mrb[0].mxu0
  %1409 = vdwg.mxu0
  %v1410 = vpack.c.bf16 %v1399, %v1396
  %v1411 = vpack.c.bf16 %v1407, %v1404
  %1414 = vrot.lane.b32.xlu0 %v1410, 32
  %v1415 = vpop.permute.xlu0 %1414
  %1416 = vrot.lane.b32.xlu0 %v1411, 32
  %v1417 = vpop.permute.xlu0 %1416
  %v1419 = vsel %vm211, %v185, %v1415
  %v1421 = vsel %vm211, %v186, %v1417
  %v1422 = vld [vmem:[%s6] sm:$0xf]
  %v1423 = vld [vmem:[%s6 + $0x4] sm:$0xf]
  %v1424 = vld [vmem:[%s6 + $0x8] sm:$0xf]
  %v1425 = vld [vmem:[%s6 + $0xc] sm:$0xf]
  %v1426 = vld [vmem:[%s6 + $0x10] sm:$0xf]
  %v1427 = vld [vmem:[%s6 + $0x14] sm:$0xf]
  %v1428 = vld [vmem:[%s6 + $0x18] sm:$0xf]
  %v1429 = vld [vmem:[%s6 + $0x1c] sm:$0xf]
  %v1430 = vld [vmem:[%s7] sm:$0x1]
  %v1432 = vlaneseq
  %v1433 = vshrl.u32 %v1432, 7
  %v1434 = vsub.s32 0, %v1433
  %v1435 = vrot.slane %v1430, %v1434
  %v1445 = vunpack.c.l.b16 %v1422
  %v1446 = vunpack.c.l.b16 %v1423
  %v1447 = vunpack.c.l.b16 %v1424
  %v1448 = vunpack.c.l.b16 %v1425
  %v1449 = vunpack.c.l.b16 %v1426
  %v1450 = vunpack.c.l.b16 %v1427
  %v1451 = vunpack.c.l.b16 %v1428
  %v1452 = vunpack.c.l.b16 %v1429
  %v1453 = vpack.c.b16 %v1446, %v1445
  %v1454 = vpack.c.b16 %v1448, %v1447
  %v1455 = vpack.c.b16 %v1450, %v1449
  %v1456 = vpack.c.b16 %v1452, %v1451
  %vm1461 = vcmask 523264
  %v1462 = vsel %vm1461, %v1419, 0
  %v1464 = vsel %vm1461, %v1421, 0
  %1466 = vmatprep.subr.bf16.mxu0 0
  %1467 = vmatpush1.bf16.msra.mxu0 %v1453
  %1468 = vmatprep.subr.bf16.mxu0 0
  %1469 = vmatpush1.bf16.msra.mxu0 %v1454
  %1470 = vmatprep.subr.bf16.mxu0 0
  %1471 = vmatpush1.bf16.msra.mxu0 %v1455
  %1472 = vmatprep.subr.bf16.mxu0 0
  %1473 = vmatpush1.bf16.msra.mxu0 %v1456
  %1474 = vmatprep.subr.bf16.mxu0 0
  %1475 = vmatpush1.bf16.msra.mxu0 0
  %1476 = vmatprep.subr.bf16.mxu0 0
  %1477 = vmatpush1.bf16.msra.mxu0 0
  %1478 = vmatprep.subr.bf16.mxu0 0
  %1479 = vmatpush1.bf16.msra.mxu0 0
  %1480 = vmatprep.subr.bf16.mxu0 0
  %1481 = vmatpush1.bf16.msra.mxu0 0
  %1482 = vmatprep.subr.bf16.mxu0 0
  %1483 = vmatpush1.bf16.msra.mxu0 0
  %1484 = vmatprep.subr.bf16.mxu0 0
  %1485 = vmatpush1.bf16.msra.mxu0 0
  %1486 = vmatprep.subr.bf16.mxu0 0
  %1487 = vmatpush1.bf16.msra.mxu0 0
  %1488 = vmatprep.subr.bf16.mxu0 0
  %1489 = vmatpush1.bf16.msra.mxu0 0
  %1490 = vmatprep.subr.bf16.mxu0 0
  %1491 = vmatpush1.bf16.msra.mxu0 0
  %1492 = vmatprep.subr.bf16.mxu0 0
  %1493 = vmatpush1.bf16.msra.mxu0 0
  %1494 = vmatprep.subr.bf16.mxu0 0
  %1495 = vmatpush1.bf16.msra.mxu0 0
  %1496 = vmatprep.subr.bf16.mxu0 0
  %1497 = vmatpush1.bf16.msra.mxu0 0
  %1498 = vmatprep.mubr.bf16.mxu0 0
  %1499 = vmatmul.mubr.bf16.gmra.mrb[0].mxu0 %v1462
  %v1500 = vpop.f32.mrb[0].mxu0
  %v1501 = vadd.f32 %v1435, %v1500
  %v1502 = vpop.f32.mrb[0].mxu0
  %v1503 = vpop.f32.mrb[0].mxu0
  %v1504 = vadd.f32 %v1435, %v1503
  %v1505 = vpop.f32.mrb[0].mxu0
  %1506 = vmatprep.mubr.bf16.mxu0 0
  %1507 = vmatmul.mubr.bf16.gmra.mrb[0].mxu0 %v1464
  %v1508 = vpop.f32.mrb[0].mxu0
  %v1509 = vadd.f32 %v1435, %v1508
  %v1510 = vpop.f32.mrb[0].mxu0
  %v1511 = vpop.f32.mrb[0].mxu0
  %v1512 = vadd.f32 %v1435, %v1511
  %v1513 = vpop.f32.mrb[0].mxu0
  %1514 = vdwg.mxu0
  %v1515 = vsel %vm1461, %v1501, 0.0
  %v1516 = vsel %vm1461, %v1504, 0.0
  %v1517 = vadd.f32 %v1515, %v1516
  %v1518 = vsel %vm1461, %v1509, 0.0
  %v1519 = vadd.f32 %v1517, %v1518
  %v1520 = vsel %vm1461, %v1512, 0.0
  %v1521 = vadd.f32 %v1519, %v1520
  %v1522 = vrot.slane %v1521, 4
  %v1523 = vadd.f32 %v1521, %v1522
  %v1524 = vrot.slane %v1523, 2
  %v1525 = vadd.f32 %v1523, %v1524
  %v1526 = vrot.slane %v1525, 1
  %v1527 = vadd.f32 %v1525, %v1526
  %v1528 = vrcp.pop 32.0
  %v1529 = vmul.f32 %v1527, %v1528
  %v1530 = vsub.f32 %v1501, %v1529
  %v1531 = vsub.f32 %v1504, %v1529
  %v1532 = vsub.f32 %v1509, %v1529
  %v1533 = vsub.f32 %v1512, %v1529
  %v1534 = vmul.f32 %v1530, %v1530
  %v1535 = vmul.f32 %v1531, %v1531
  %v1536 = vmul.f32 %v1532, %v1532
  %v1537 = vmul.f32 %v1533, %v1533
  %v1538 = vsel %vm1461, %v1534, 0.0
  %v1539 = vsel %vm1461, %v1535, 0.0
  %v1540 = vadd.f32 %v1538, %v1539
  %v1541 = vsel %vm1461, %v1536, 0.0
  %v1542 = vadd.f32 %v1540, %v1541
  %v1543 = vsel %vm1461, %v1537, 0.0
  %v1544 = vadd.f32 %v1542, %v1543
  %v1545 = vrot.slane %v1544, 4
  %v1546 = vadd.f32 %v1544, %v1545
  %v1547 = vrot.slane %v1546, 2
  %v1548 = vadd.f32 %v1546, %v1547
  %v1549 = vrot.slane %v1548, 1
  %v1550 = vadd.f32 %v1548, %v1549
  %v1551 = vmul.f32 %v1550, %v1528
  %v1552 = vadd.f32 %v1551, 1e-05
  %v1553 = vrsqrt.pop %v1552
  %v1554 = vld [vmem:[%s8] sm:$0x1]
  %v1555 = vmul.f32 %v1553, %v1554
  %v1556 = vlaneseq
  %v1557 = vshrl.u32 %v1556, 7
  %v1558 = vsub.s32 0, %v1557
  %v1559 = vrot.slane %v1555, %v1558
  %v1560 = vmul.f32 %v1530, %v1559
  %v1561 = vmul.f32 %v1531, %v1559
  %v1562 = vmul.f32 %v1532, %v1559
  %v1563 = vmul.f32 %v1533, %v1559
  %v1564 = vld [vmem:[%s8 + $0x1] sm:$0x1]
  %v1565 = vlaneseq
  %v1566 = vshrl.u32 %v1565, 7
  %v1567 = vsub.s32 0, %v1566
  %v1568 = vrot.slane %v1564, %v1567
  %v1569 = vadd.f32 %v1560, %v1568
  %v1570 = vadd.f32 %v1561, %v1568
  %v1571 = vadd.f32 %v1562, %v1568
  %v1572 = vadd.f32 %v1563, %v1568
  %v1573 = vmax.f32 %v1569, 0.0
  %v1574 = vmax.f32 %v1570, 0.0
  %v1575 = vmax.f32 %v1571, 0.0
  %v1576 = vmax.f32 %v1572, 0.0
  %v1577 = vpack.c.bf16 %v1574, %v1573
  %v1578 = vpack.c.bf16 %v1576, %v1575
  %v1579 = vld [vmem:[%s9] sm:$0xf]
  %v1580 = vld [vmem:[%s9 + $0x4] sm:$0xf]
  %v1581 = vld [vmem:[%s9 + $0x8] sm:$0xf]
  %v1582 = vld [vmem:[%s9 + $0xc] sm:$0xf]
  %v1583 = vld [vmem:[%s9 + $0x10] sm:$0xf]
  %v1584 = vld [vmem:[%s9 + $0x14] sm:$0xf]
  %v1585 = vld [vmem:[%s9 + $0x18] sm:$0xf]
  %v1586 = vld [vmem:[%s9 + $0x1c] sm:$0xf]
  %v1587 = vld [vmem:[%s10] sm:$0x1]
  %v1589 = vlaneseq
  %v1590 = vshrl.u32 %v1589, 7
  %v1591 = vsub.s32 0, %v1590
  %v1592 = vrot.slane %v1587, %v1591
  %v1602 = vunpack.c.l.b16 %v1579
  %v1603 = vunpack.c.l.b16 %v1580
  %v1604 = vunpack.c.l.b16 %v1581
  %v1605 = vunpack.c.l.b16 %v1582
  %v1606 = vunpack.c.l.b16 %v1583
  %v1607 = vunpack.c.l.b16 %v1584
  %v1608 = vunpack.c.l.b16 %v1585
  %v1609 = vunpack.c.l.b16 %v1586
  %v1610 = vpack.c.b16 %v1603, %v1602
  %v1611 = vpack.c.b16 %v1605, %v1604
  %v1612 = vpack.c.b16 %v1607, %v1606
  %v1613 = vpack.c.b16 %v1609, %v1608
  %v1619 = vsel %vm1461, %v1577, 0
  %v1622 = vsel %vm1461, %v1578, 0
  %1624 = vmatprep.subr.bf16.mxu0 0
  %1625 = vmatpush1.bf16.msra.mxu0 %v1610
  %1626 = vmatprep.subr.bf16.mxu0 0
  %1627 = vmatpush1.bf16.msra.mxu0 %v1611
  %1628 = vmatprep.subr.bf16.mxu0 0
  %1629 = vmatpush1.bf16.msra.mxu0 %v1612
  %1630 = vmatprep.subr.bf16.mxu0 0
  %1631 = vmatpush1.bf16.msra.mxu0 %v1613
  %1632 = vmatprep.subr.bf16.mxu0 0
  %1633 = vmatpush1.bf16.msra.mxu0 0
  %1634 = vmatprep.subr.bf16.mxu0 0
  %1635 = vmatpush1.bf16.msra.mxu0 0
  %1636 = vmatprep.subr.bf16.mxu0 0
  %1637 = vmatpush1.bf16.msra.mxu0 0
  %1638 = vmatprep.subr.bf16.mxu0 0
  %1639 = vmatpush1.bf16.msra.mxu0 0
  %1640 = vmatprep.subr.bf16.mxu0 0
  %1641 = vmatpush1.bf16.msra.mxu0 0
  %1642 = vmatprep.subr.bf16.mxu0 0
  %1643 = vmatpush1.bf16.msra.mxu0 0
  %1644 = vmatprep.subr.bf16.mxu0 0
  %1645 = vmatpush1.bf16.msra.mxu0 0
  %1646 = vmatprep.subr.bf16.mxu0 0
  %1647 = vmatpush1.bf16.msra.mxu0 0
  %1648 = vmatprep.subr.bf16.mxu0 0
  %1649 = vmatpush1.bf16.msra.mxu0 0
  %1650 = vmatprep.subr.bf16.mxu0 0
  %1651 = vmatpush1.bf16.msra.mxu0 0
  %1652 = vmatprep.subr.bf16.mxu0 0
  %1653 = vmatpush1.bf16.msra.mxu0 0
  %1654 = vmatprep.subr.bf16.mxu0 0
  %1655 = vmatpush1.bf16.msra.mxu0 0
  %1656 = vmatprep.mubr.bf16.mxu0 0
  %1657 = vmatmul.mubr.bf16.gmra.mrb[0].mxu0 %v1619
  %v1658 = vpop.f32.mrb[0].mxu0
  %v1659 = vadd.f32 %v1592, %v1658
  %v1660 = vpop.f32.mrb[0].mxu0
  %v1661 = vpop.f32.mrb[0].mxu0
  %v1662 = vadd.f32 %v1592, %v1661
  %v1663 = vpop.f32.mrb[0].mxu0
  %1664 = vmatprep.mubr.bf16.mxu0 0
  %1665 = vmatmul.mubr.bf16.gmra.mrb[0].mxu0 %v1622
  %v1666 = vpop.f32.mrb[0].mxu0
  %v1667 = vadd.f32 %v1592, %v1666
  %v1668 = vpop.f32.mrb[0].mxu0
  %v1669 = vpop.f32.mrb[0].mxu0
  %v1670 = vadd.f32 %v1592, %v1669
  %v1671 = vpop.f32.mrb[0].mxu0
  %1672 = vdwg.mxu0
  %1673 = vxpose.xlu0.b32.start [1/16] %v1659, 128
  %1674 = vxpose.xlu0.b32.cont [2/16] %v1662, 128
  %1675 = vxpose.xlu0.b32.cont [3/16] 0.0, 128
  %1676 = vxpose.xlu0.b32.cont [4/16] 0.0, 128
  %1677 = vxpose.xlu0.b32.cont [5/16] 0.0, 128
  %1678 = vxpose.xlu0.b32.cont [6/16] 0.0, 128
  %1679 = vxpose.xlu0.b32.cont [7/16] 0.0, 128
  %1680 = vxpose.xlu0.b32.cont [8/16] 0.0, 128
  %1681 = vxpose.xlu0.b32.cont [9/16] 0.0, 128
  %1682 = vxpose.xlu0.b32.cont [10/16] 0.0, 128
  %1683 = vxpose.xlu0.b32.cont [11/16] 0.0, 128
  %1684 = vxpose.xlu0.b32.cont [12/16] 0.0, 128
  %1685 = vxpose.xlu0.b32.cont [13/16] 0.0, 128
  %1686 = vxpose.xlu0.b32.cont [14/16] 0.0, 128
  %1687 = vxpose.xlu0.b32.cont [15/16] 0.0, 128
  %1688 = vxpose.xlu0.b32.end [16/16] 0.0, 128
  %v1689 = vpop.trf.xlu0
  %v1690 = vpop.trf.xlu0
  %v1691 = vpop.trf.xlu0
  %v1692 = vpop.trf.xlu0
  %v1693 = vpop.trf.xlu0
  %v1694 = vpop.trf.xlu0
  %v1695 = vpop.trf.xlu0
  %v1696 = vpop.trf.xlu0
  %v1697 = vpop.trf.xlu0
  %v1698 = vpop.trf.xlu0
  %v1699 = vpop.trf.xlu0
  %v1700 = vpop.trf.xlu0
  %v1701 = vpop.trf.xlu0
  %v1702 = vpop.trf.xlu0
  %v1703 = vpop.trf.xlu0
  %v1704 = vpop.trf.xlu0
  %v1705 = vadd.f32 %v39, %v1689
  %v1706 = vadd.f32 %v40, %v1690
  %v1707 = vadd.f32 %v41, %v1691
  %v1708 = vadd.f32 %v42, %v1692
  %1709 = vst.msk [vmem:[%s11] sm:$0xff] %vm800, %v1705
  %1710 = vst.msk [vmem:[%s11 + $0x8] sm:$0xff] %vm800, %v1706
  %1711 = vst.msk [vmem:[%s11 + $0x10] sm:$0xff] %vm800, %v1707
  %1712 = vst.msk [vmem:[%s11 + $0x18] sm:$0xff] %vm800, %v1708
  %v1713 = vld [vmem:[%s75] sm:$0xff]
  %v1714 = vld [vmem:[%s75 + $0x8] sm:$0xff]
  %v1715 = vld [vmem:[%s75 + $0x10] sm:$0xff]
  %v1716 = vld [vmem:[%s75 + $0x18] sm:$0xff]
  %1717 = vxpose.xlu0.b32.start [1/16] %v1667, 128
  %1718 = vxpose.xlu0.b32.cont [2/16] %v1670, 128
  %1719 = vxpose.xlu0.b32.cont [3/16] 0.0, 128
  %1720 = vxpose.xlu0.b32.cont [4/16] 0.0, 128
  %1721 = vxpose.xlu0.b32.cont [5/16] 0.0, 128
  %1722 = vxpose.xlu0.b32.cont [6/16] 0.0, 128
  %1723 = vxpose.xlu0.b32.cont [7/16] 0.0, 128
  %1724 = vxpose.xlu0.b32.cont [8/16] 0.0, 128
  %1725 = vxpose.xlu0.b32.cont [9/16] 0.0, 128
  %1726 = vxpose.xlu0.b32.cont [10/16] 0.0, 128
  %1727 = vxpose.xlu0.b32.cont [11/16] 0.0, 128
  %1728 = vxpose.xlu0.b32.cont [12/16] 0.0, 128
  %1729 = vxpose.xlu0.b32.cont [13/16] 0.0, 128
  %1730 = vxpose.xlu0.b32.cont [14/16] 0.0, 128
  %1731 = vxpose.xlu0.b32.cont [15/16] 0.0, 128
  %1732 = vxpose.xlu0.b32.end [16/16] 0.0, 128
  %v1733 = vpop.trf.xlu0
  %v1734 = vpop.trf.xlu0
  %v1735 = vpop.trf.xlu0
  %v1736 = vpop.trf.xlu0
  %v1737 = vpop.trf.xlu0
  %v1738 = vpop.trf.xlu0
  %v1739 = vpop.trf.xlu0
  %v1740 = vpop.trf.xlu0
  %v1741 = vpop.trf.xlu0
  %v1742 = vpop.trf.xlu0
  %v1743 = vpop.trf.xlu0
  %v1744 = vpop.trf.xlu0
  %v1745 = vpop.trf.xlu0
  %v1746 = vpop.trf.xlu0
  %v1747 = vpop.trf.xlu0
  %v1748 = vpop.trf.xlu0
  %v1749 = vadd.f32 %v1713, %v1733
  %v1750 = vadd.f32 %v1714, %v1734
  %v1751 = vadd.f32 %v1715, %v1735
  %v1752 = vadd.f32 %v1716, %v1736
  %s1753 = scalar_lea.vmem %s11, 32
  %1754 = vst.msk [vmem:[%s1753] sm:$0xff] %vm800, %v1749
  %1755 = vst.msk [vmem:[%s1753 + $0x8] sm:$0xff] %vm800, %v1750
  %1756 = vst.msk [vmem:[%s1753 + $0x10] sm:$0xff] %vm800, %v1751
  %1757 = vst.msk [vmem:[%s1753 + $0x18] sm:$0xff] %vm800, %v1752
  // Predicated region
  $region46: #{tpu_custom_call.1} parent=0 // pred_check
    _
  $region47: #{tpu_custom_call.1} parent=0 // pred_check_branch
    %1759 = sbr.rel (0) target = $region49
  $region48: #{tpu_custom_call.1} parent=0 // pred_region
    _
  $region49: #{tpu_custom_call.1} parent=0 // pred_fallthru
    _
  // Predicated region
  $region50: #{tpu_custom_call.1} parent=0 // pred_check
    _
  $region51: #{tpu_custom_call.1} parent=0 // pred_check_branch
    %1761 = sbr.rel (0) target = $region53
  $region52: #{tpu_custom_call.1} parent=0 // pred_region
    _
  $region53: #{tpu_custom_call.1} parent=0 // pred_fallthru
    _

</llo_original>
